<compile_context>
chip_gen: v7x
topology: tpu7x:2x2x1
jax: 0.10.0
libtpu: 0.0.40
codegen_flags: <defaults>
</compile_context>

<pallas_src>
import numpy as np

import jax
import jax.numpy as jnp
from jax import lax
from jax.experimental import pallas as pl
from jax.experimental.pallas import tpu as pltpu


# ---------------------------------------------------------------------------
# Kernel
# ---------------------------------------------------------------------------
def _convnet_kernel(x_ref, m1_ref, wf_ref, bf_ref,
                    b1_ref, w2_ref, b2_ref, w3_ref, b3_ref,
                    o_ref, feat_ref):
    """One fused forward step for a tile of `bt` images.

    x_ref   : (bt, 784)  raw flattened 28x28 images (native layout, batch on
                         sublanes) -- streamed straight from HBM, no prep copy.
    m1_ref  : (256, 784) conv1 (+ its zero padding) as a dense locally-connected
                         matrix; rows ordered r = k2*64 + k3*16 + s where k2/k3
                         are the conv2/conv3 2x2 window offsets and s the final
                         4x4 spatial position.
    wf_ref  : (10, 64)   fc1 weight, torch (out, in) layout.
    bf_ref  : (10, 1)    fc1 bias.
    b1/w2/b2/w3/b3       conv scalars, SMEM.
    o_ref   : (10, bt)   class probabilities, batch on the lane axis.
    feat_ref: (64, bt)   VMEM scratch for the stacked conv3 features.
    """
    # conv1 + padding + ReLU as ONE MXU matmul (K = 784). Contracting the last
    # dims of both operands (an `m1 @ x.T` dot) gives the transpose for free:
    # the (256, bt) result puts batch on lanes, so all later ops are lane-dense.
    h1 = lax.dot_general(m1_ref[...], x_ref[...],
                         dimension_numbers=(((1,), (1,)), ((), ())),
                         preferred_element_type=jnp.float32)
    h1 = jnp.maximum(h1 + b1_ref[0], 0.0)                      # (256, bt)

    # conv2 + ReLU on the VPU: 4 contiguous 64-row sublane slices.
    h2 = b2_ref[0] + w2_ref[0] * h1[0:64]
    for k2 in range(1, 4):
        h2 = h2 + w2_ref[k2] * h1[64 * k2:64 * (k2 + 1)]
    h2 = jnp.maximum(h2, 0.0)                                  # (64, bt)

    # conv3 (1 -> 4 channels) + ReLU; feat rows follow torch's flatten(1)
    # order (ch*16 + s), staged in a VMEM scratch so fc1 is a single dot.
    for ch in range(4):
        f = b3_ref[ch] + w3_ref[4 * ch] * h2[0:16]
        for k3 in range(1, 4):
            f = f + w3_ref[4 * ch + k3] * h2[16 * k3:16 * (k3 + 1)]
        feat_ref[16 * ch:16 * (ch + 1), :] = jnp.maximum(f, 0.0)

    # fc1: one K=64 MXU dot, (10, 64) @ (64, bt) -> lane-dense (10, bt).
    logits = jnp.dot(wf_ref[...], feat_ref[...],
                     preferred_element_type=jnp.float32) + bf_ref[...]

    # Softmax over the 10 classes (they live on the sublane axis).  With only
    # 10 rows an unrolled VPU max/sum is free and avoids a cross-sublane
    # reduction relayout; reciprocal runs on the EUP + one Newton step.
    m = logits[0:1, :]
    for i in range(1, 10):
        m = jnp.maximum(m, logits[i:i + 1, :])
    e = jnp.exp(logits - m)
    s = e[0:1, :]
    for i in range(1, 10):
        s = s + e[i:i + 1, :]
    inv = pl.reciprocal(s, approx=True)
    inv = inv * (2.0 - s * inv)                 # one Newton step -> ~f32 accurate
    o_ref[...] = (e * inv).astype(o_ref.dtype)


# ---------------------------------------------------------------------------
# Wrapper
# ---------------------------------------------------------------------------
def _batch_tiling(batch):
    """(padded_batch, batch_tile) for the batch grid.

    <=128 samples: one grid step (no padding).  Otherwise 128-sample tiles
    (~0.4 MB of input per step: big enough to amortize the ~0.35 us/step grid
    overhead, small enough that the (256, Bt) conv1 slab stays in vregs).
    """
    if batch <= 128:
        return batch, batch
    tile = 128
    padded = ((batch + tile - 1) // tile) * tile
    return padded, tile


@jax.jit
def convnet_forward(x, params):
    # x: (B, 1, 28, 28) float32, NCHW (PyTorch convention).
    b = x.shape[0]
    xf = x.reshape(b, 28 * 28)                  # free view, no HBM copy
    bp, bt = _batch_tiling(b)
    if bp != b:
        # TODO(synk): a masked tail block would avoid this pad copy for large
        # ragged batches; irrelevant at B <= 128 where no padding happens.
        xf = jnp.pad(xf, ((0, bp - b), (0, 0)))

    grid = (bp // bt,)
    smem = pl.BlockSpec(memory_space=pltpu.MemorySpace.SMEM)

    flops = bp * (2 * 784 * 256 + 8 * 64 + 8 * 64 + 2 * 64 * 10 + 6 * 10)
    bytes_accessed = bp * 784 * 4 + 256 * 784 * 4 + bp * 10 * 4 + (10 * 65 + 25) * 4

    probs_t = pl.pallas_call(
        _convnet_kernel,
        out_shape=jax.ShapeDtypeStruct((10, bp), jnp.float32),
        grid=grid,
        in_specs=[
            pl.BlockSpec((bt, 784), lambda i: (i, 0)),    # images (batch tile)
            pl.BlockSpec((256, 784), lambda i: (0, 0)),   # conv1 matrix (resident)
            pl.BlockSpec((10, 64), lambda i: (0, 0)),     # fc1 weight
            pl.BlockSpec((10, 1), lambda i: (0, 0)),      # fc1 bias
            smem, smem, smem, smem, smem,                 # b1, w2, b2, w3, b3
        ],
        out_specs=pl.BlockSpec((10, bt), lambda i: (0, i)),
        scratch_shapes=[pltpu.VMEM((64, bt), jnp.float32)],
        compiler_params=pltpu.CompilerParams(
            dimension_semantics=("parallel",)),
        cost_estimate=pl.CostEstimate(
            flops=flops, transcendentals=bp * 10, bytes_accessed=bytes_accessed),
    )(xf, params["m1"], params["wf"], params["bf"],
      params["b1"], params["w2"], params["b2"], params["w3"], params["b3"])

    return probs_t[:, :b].T                     # (B, 10), torch convention


# ---------------------------------------------------------------------------
# Parameters
# ---------------------------------------------------------------------------
def _conv1_matrix(w1_flat):
    """Lower conv1 (2x2, stride 2, padding 2) to a dense (256, 784) matrix.

    Row r = k2*64 + k3*16 + s maps to conv1 output position
        (I1, J1) = (4*oi3 + 2*a3 + a2, 4*oj3 + 2*b3 + b2),
    i.e. exactly the conv1 output that conv2 window-offset k2 = (a2,b2),
    conv3 window-offset k3 = (a3,b3) and final position s = (oi3,oj3) consume.
    Columns are flattened input pixels i*28 + j; zero-padding pixels simply
    contribute nothing (bias is added in-kernel).
    """
    w = np.asarray(w1_flat, np.float32).reshape(2, 2)
    m = np.zeros((256, 784), np.float32)
    r = np.arange(256)
    a2, b2 = (r >> 7) & 1, (r >> 6) & 1
    a3, b3 = (r >> 5) & 1, (r >> 4) & 1
    oi3, oj3 = (r >> 2) & 3, r & 3
    i1 = 4 * oi3 + 2 * a3 + a2
    j1 = 4 * oj3 + 2 * b3 + b2
    for a1 in range(2):
        for c1 in range(2):
            i = 2 * i1 + a1 - 2                  # unpadded input row
            j = 2 * j1 + c1 - 2                  # unpadded input col
            ok = (i >= 0) & (i < 28) & (j >= 0) & (j < 28)
            m[r[ok], (i * 28 + j)[ok]] += w[a1, c1]
    return jnp.asarray(m)


def init_params(key):
    ks = jax.random.split(key, 8)

    def uniform(k, shape, fan_in):
        bound = 1.0 / np.sqrt(float(fan_in))
        return jax.random.uniform(k, shape, jnp.float32, -bound, bound)

    # PyTorch weight layouts, then reshaped to the kernel's flat forms.
    w1 = uniform(ks[0], (1, 1, 2, 2), 4)    # Conv2d(1, 1, 2, 2, 2)
    b1 = uniform(ks[1], (1,), 4)
    w2 = uniform(ks[2], (1, 1, 2, 2), 4)    # Conv2d(1, 1, 2, 2)
    b2 = uniform(ks[3], (1,), 4)
    w3 = uniform(ks[4], (4, 1, 2, 2), 4)    # Conv2d(1, 4, 2, 2)
    b3 = uniform(ks[5], (4,), 4)
    wf = uniform(ks[6], (10, 64), 64)       # Linear(64, 10): (out, in)
    bf = uniform(ks[7], (10,), 64)
    return {
        "w1": w1.reshape(4), "b1": b1,
        "w2": w2.reshape(4), "b2": b2,
        "w3": w3.reshape(16), "b3": b3,      # row-major -> index ch*4 + (a3*2+b3)
        "wf": wf,                            # (10, 64) torch layout
        "bf": bf.reshape(10, 1),             # column bias for (10, Bt) logits
        # conv1 lowered once to a locally-connected matrix (derived parameter,
        # ~0.8 MB; read once per forward call).
        "m1": _conv1_matrix(w1.reshape(4)),
    }


# ---------------------------------------------------------------------------
# Pure-JAX reference (no Pallas), for validation.
# ---------------------------------------------------------------------------
def convnet_reference(x, params):
    dn = ("NCHW", "OIHW", "NCHW")
    hp = lax.Precision.HIGHEST
    w1 = params["w1"].reshape(1, 1, 2, 2)
    w2 = params["w2"].reshape(1, 1, 2, 2)
    w3 = params["w3"].reshape(4, 1, 2, 2)
    h = lax.conv_general_dilated(x, w1, (2, 2), ((2, 2), (2, 2)),
                                 dimension_numbers=dn, precision=hp)
    h = jnp.maximum(h + params["b1"].reshape(1, 1, 1, 1), 0.0)
    h = lax.conv_general_dilated(h, w2, (2, 2), ((0, 0), (0, 0)),
                                 dimension_numbers=dn, precision=hp)
    h = jnp.maximum(h + params["b2"].reshape(1, 1, 1, 1), 0.0)
    h = lax.conv_general_dilated(h, w3, (2, 2), ((0, 0), (0, 0)),
                                 dimension_numbers=dn, precision=hp)
    h = jnp.maximum(h + params["b3"].reshape(1, 4, 1, 1), 0.0)
    feat = h.reshape(x.shape[0], 64)                 # torch .flatten(1) order
    logits = jnp.dot(feat, params["wf"].T, precision=hp) + params["bf"].reshape(1, 10)
    return jax.nn.softmax(logits, axis=-1)


if __name__ == "__main__":
    xkey, _ = jax.random.split(jax.random.PRNGKey(0))
    # Input spatial size is forced to 28x28 by Linear(64, 10) after conv3.
    x = jax.random.normal(xkey, (2, 1, 28, 28), jnp.float32)
    params = init_params(jax.random.PRNGKey(42))

    out = jax.block_until_ready(convnet_forward(x, params))

    assert out.shape == (2, 10)
    assert bool(jnp.all(jnp.isfinite(out)))
    assert bool(jnp.allclose(jnp.sum(out, axis=-1), 1.0, atol=1e-4))

    ref = convnet_reference(x, params)
    # Tolerance covers MXU f32 pass differences across TPU generations; the
    # kernel accumulates everything in f32 and typically matches to ~1e-6.
    assert bool(jnp.allclose(out, ref, atol=5e-4, rtol=5e-4)), \
        float(jnp.max(jnp.abs(out - ref)))
    print("KERNEL_OK")
</pallas_src>

<mosaic_0001>
module attributes {stable_mosaic.version = 11 : i64} {
  func.func @_convnet_kernel(%arg0: i32, %arg1: memref<2x784xf32, #tpu.memory_space<vmem>>, %arg2: memref<256x784xf32, #tpu.memory_space<vmem>>, %arg3: memref<10x64xf32, #tpu.memory_space<vmem>>, %arg4: memref<10x1xf32, #tpu.memory_space<vmem>>, %arg5: memref<1xf32, #tpu.memory_space<smem>>, %arg6: memref<4xf32, #tpu.memory_space<smem>>, %arg7: memref<1xf32, #tpu.memory_space<smem>>, %arg8: memref<16xf32, #tpu.memory_space<smem>>, %arg9: memref<4xf32, #tpu.memory_space<smem>>, %arg10: memref<10x2xf32, #tpu.memory_space<vmem>>, %arg11: memref<64x2xf32, #tpu.memory_space<vmem>>) attributes {dimension_semantics = [#tpu.dimension_semantics<parallel>], iteration_bounds = array<i64: 1>, scalar_prefetch = 0 : i64, scratch_operands = 1 : i64, tpu.core_type = #tpu.core_type<tc>, window_params = [{transform_indices = @transform_0, window_bounds = array<i64: 2, 784>}, {pipeline_mode = #tpu.pipeline_mode<synchronous>, transform_indices = @transform_1, window_bounds = array<i64: 256, 784>}, {pipeline_mode = #tpu.pipeline_mode<synchronous>, transform_indices = @transform_2, window_bounds = array<i64: 10, 64>}, {pipeline_mode = #tpu.pipeline_mode<synchronous>, transform_indices = @transform_3, window_bounds = array<i64: 10, 1>}, {transform_indices = @transform_4, window_bounds = array<i64: 1>}, {transform_indices = @transform_5, window_bounds = array<i64: 4>}, {transform_indices = @transform_6, window_bounds = array<i64: 1>}, {transform_indices = @transform_7, window_bounds = array<i64: 16>}, {transform_indices = @transform_8, window_bounds = array<i64: 4>}, {transform_indices = @transform_9, window_bounds = array<i64: 10, 2>}]} {
    %c0 = arith.constant 0 : index
    %c0_0 = arith.constant 0 : index
    %0 = vector.load %arg2[%c0, %c0_0] : memref<256x784xf32, #tpu.memory_space<vmem>>, vector<256x784xf32>
    %c0_1 = arith.constant 0 : index
    %c0_2 = arith.constant 0 : index
    %1 = vector.load %arg1[%c0_1, %c0_2] : memref<2x784xf32, #tpu.memory_space<vmem>>, vector<2x784xf32>
    %cst = arith.constant dense<0.000000e+00> : vector<256x2xf32>
    %2 = tpu.matmul %0, %1, %cst {dimension_numbers = #tpu.dot_dimension_numbers<[1], [1], [0], [0], [0, 0, 1, 0], [], []>} : vector<256x784xf32>, vector<2x784xf32>, vector<256x2xf32> -> vector<256x2xf32>
    %c0_3 = arith.constant 0 : index
    %3 = memref.load %arg5[%c0_3] : memref<1xf32, #tpu.memory_space<smem>>
    %4 = vector.broadcast %3 : f32 to vector<256x2xf32>
    %5 = arith.addf %2, %4 : vector<256x2xf32>
    %cst_4 = arith.constant 0.000000e+00 : f32
    %6 = vector.broadcast %cst_4 : f32 to vector<256x2xf32>
    %7 = arith.maximumf %5, %6 : vector<256x2xf32>
    %c0_5 = arith.constant 0 : index
    %8 = memref.load %arg7[%c0_5] : memref<1xf32, #tpu.memory_space<smem>>
    %c0_6 = arith.constant 0 : index
    %9 = memref.load %arg6[%c0_6] : memref<4xf32, #tpu.memory_space<smem>>
    %10 = vector.extract_strided_slice %7 {offsets = [0, 0], sizes = [64, 2], strides = [1, 1]} : vector<256x2xf32> to vector<64x2xf32>
    %11 = vector.broadcast %9 : f32 to vector<64x2xf32>
    %12 = arith.mulf %11, %10 : vector<64x2xf32>
    %13 = vector.broadcast %8 : f32 to vector<64x2xf32>
    %14 = arith.addf %13, %12 : vector<64x2xf32>
    %c1 = arith.constant 1 : index
    %15 = memref.load %arg6[%c1] : memref<4xf32, #tpu.memory_space<smem>>
    %16 = vector.extract_strided_slice %7 {offsets = [64, 0], sizes = [64, 2], strides = [1, 1]} : vector<256x2xf32> to vector<64x2xf32>
    %17 = vector.broadcast %15 : f32 to vector<64x2xf32>
    %18 = arith.mulf %17, %16 : vector<64x2xf32>
    %19 = arith.addf %14, %18 : vector<64x2xf32>
    %c2 = arith.constant 2 : index
    %20 = memref.load %arg6[%c2] : memref<4xf32, #tpu.memory_space<smem>>
    %21 = vector.extract_strided_slice %7 {offsets = [128, 0], sizes = [64, 2], strides = [1, 1]} : vector<256x2xf32> to vector<64x2xf32>
    %22 = vector.broadcast %20 : f32 to vector<64x2xf32>
    %23 = arith.mulf %22, %21 : vector<64x2xf32>
    %24 = arith.addf %19, %23 : vector<64x2xf32>
    %c3 = arith.constant 3 : index
    %25 = memref.load %arg6[%c3] : memref<4xf32, #tpu.memory_space<smem>>
    %26 = vector.extract_strided_slice %7 {offsets = [192, 0], sizes = [64, 2], strides = [1, 1]} : vector<256x2xf32> to vector<64x2xf32>
    %27 = vector.broadcast %25 : f32 to vector<64x2xf32>
    %28 = arith.mulf %27, %26 : vector<64x2xf32>
    %29 = arith.addf %24, %28 : vector<64x2xf32>
    %cst_7 = arith.constant 0.000000e+00 : f32
    %30 = vector.broadcast %cst_7 : f32 to vector<64x2xf32>
    %31 = arith.maximumf %29, %30 : vector<64x2xf32>
    %c0_8 = arith.constant 0 : index
    %32 = memref.load %arg9[%c0_8] : memref<4xf32, #tpu.memory_space<smem>>
    %c0_9 = arith.constant 0 : index
    %33 = memref.load %arg8[%c0_9] : memref<16xf32, #tpu.memory_space<smem>>
    %34 = vector.extract_strided_slice %31 {offsets = [0, 0], sizes = [16, 2], strides = [1, 1]} : vector<64x2xf32> to vector<16x2xf32>
    %35 = vector.broadcast %33 : f32 to vector<16x2xf32>
    %36 = arith.mulf %35, %34 : vector<16x2xf32>
    %37 = vector.broadcast %32 : f32 to vector<16x2xf32>
    %38 = arith.addf %37, %36 : vector<16x2xf32>
    %c1_10 = arith.constant 1 : index
    %39 = memref.load %arg8[%c1_10] : memref<16xf32, #tpu.memory_space<smem>>
    %40 = vector.extract_strided_slice %31 {offsets = [16, 0], sizes = [16, 2], strides = [1, 1]} : vector<64x2xf32> to vector<16x2xf32>
    %41 = vector.broadcast %39 : f32 to vector<16x2xf32>
    %42 = arith.mulf %41, %40 : vector<16x2xf32>
    %43 = arith.addf %38, %42 : vector<16x2xf32>
    %c2_11 = arith.constant 2 : index
    %44 = memref.load %arg8[%c2_11] : memref<16xf32, #tpu.memory_space<smem>>
    %45 = vector.extract_strided_slice %31 {offsets = [32, 0], sizes = [16, 2], strides = [1, 1]} : vector<64x2xf32> to vector<16x2xf32>
    %46 = vector.broadcast %44 : f32 to vector<16x2xf32>
    %47 = arith.mulf %46, %45 : vector<16x2xf32>
    %48 = arith.addf %43, %47 : vector<16x2xf32>
    %c3_12 = arith.constant 3 : index
    %49 = memref.load %arg8[%c3_12] : memref<16xf32, #tpu.memory_space<smem>>
    %50 = vector.extract_strided_slice %31 {offsets = [48, 0], sizes = [16, 2], strides = [1, 1]} : vector<64x2xf32> to vector<16x2xf32>
    %51 = vector.broadcast %49 : f32 to vector<16x2xf32>
    %52 = arith.mulf %51, %50 : vector<16x2xf32>
    %53 = arith.addf %48, %52 : vector<16x2xf32>
    %cst_13 = arith.constant 0.000000e+00 : f32
    %54 = vector.broadcast %cst_13 : f32 to vector<16x2xf32>
    %55 = arith.maximumf %53, %54 : vector<16x2xf32>
    %c0_14 = arith.constant 0 : index
    %c0_15 = arith.constant 0 : index
    %56 = vector.load %arg11[%c0_14, %c0_15] : memref<64x2xf32, #tpu.memory_space<vmem>>, vector<16x2xf32>
    tpu.vector_store %arg11[%c0_14, %c0_15], %55 {strides = array<i32>} : memref<64x2xf32, #tpu.memory_space<vmem>>, vector<16x2xf32>,
    %c1_16 = arith.constant 1 : index
    %57 = memref.load %arg9[%c1_16] : memref<4xf32, #tpu.memory_space<smem>>
    %c4 = arith.constant 4 : index
    %58 = memref.load %arg8[%c4] : memref<16xf32, #tpu.memory_space<smem>>
    %59 = vector.extract_strided_slice %31 {offsets = [0, 0], sizes = [16, 2], strides = [1, 1]} : vector<64x2xf32> to vector<16x2xf32>
    %60 = vector.broadcast %58 : f32 to vector<16x2xf32>
    %61 = arith.mulf %60, %59 : vector<16x2xf32>
    %62 = vector.broadcast %57 : f32 to vector<16x2xf32>
    %63 = arith.addf %62, %61 : vector<16x2xf32>
    %c5 = arith.constant 5 : index
    %64 = memref.load %arg8[%c5] : memref<16xf32, #tpu.memory_space<smem>>
    %65 = vector.extract_strided_slice %31 {offsets = [16, 0], sizes = [16, 2], strides = [1, 1]} : vector<64x2xf32> to vector<16x2xf32>
    %66 = vector.broadcast %64 : f32 to vector<16x2xf32>
    %67 = arith.mulf %66, %65 : vector<16x2xf32>
    %68 = arith.addf %63, %67 : vector<16x2xf32>
    %c6 = arith.constant 6 : index
    %69 = memref.load %arg8[%c6] : memref<16xf32, #tpu.memory_space<smem>>
    %70 = vector.extract_strided_slice %31 {offsets = [32, 0], sizes = [16, 2], strides = [1, 1]} : vector<64x2xf32> to vector<16x2xf32>
    %71 = vector.broadcast %69 : f32 to vector<16x2xf32>
    %72 = arith.mulf %71, %70 : vector<16x2xf32>
    %73 = arith.addf %68, %72 : vector<16x2xf32>
    %c7 = arith.constant 7 : index
    %74 = memref.load %arg8[%c7] : memref<16xf32, #tpu.memory_space<smem>>
    %75 = vector.extract_strided_slice %31 {offsets = [48, 0], sizes = [16, 2], strides = [1, 1]} : vector<64x2xf32> to vector<16x2xf32>
    %76 = vector.broadcast %74 : f32 to vector<16x2xf32>
    %77 = arith.mulf %76, %75 : vector<16x2xf32>
    %78 = arith.addf %73, %77 : vector<16x2xf32>
    %cst_17 = arith.constant 0.000000e+00 : f32
    %79 = vector.broadcast %cst_17 : f32 to vector<16x2xf32>
    %80 = arith.maximumf %78, %79 : vector<16x2xf32>
    %c16 = arith.constant 16 : index
    %c0_18 = arith.constant 0 : index
    %81 = vector.load %arg11[%c16, %c0_18] : memref<64x2xf32, #tpu.memory_space<vmem>>, vector<16x2xf32>
    tpu.vector_store %arg11[%c16, %c0_18], %80 {strides = array<i32>} : memref<64x2xf32, #tpu.memory_space<vmem>>, vector<16x2xf32>,
    %c2_19 = arith.constant 2 : index
    %82 = memref.load %arg9[%c2_19] : memref<4xf32, #tpu.memory_space<smem>>
    %c8 = arith.constant 8 : index
    %83 = memref.load %arg8[%c8] : memref<16xf32, #tpu.memory_space<smem>>
    %84 = vector.extract_strided_slice %31 {offsets = [0, 0], sizes = [16, 2], strides = [1, 1]} : vector<64x2xf32> to vector<16x2xf32>
    %85 = vector.broadcast %83 : f32 to vector<16x2xf32>
    %86 = arith.mulf %85, %84 : vector<16x2xf32>
    %87 = vector.broadcast %82 : f32 to vector<16x2xf32>
    %88 = arith.addf %87, %86 : vector<16x2xf32>
    %c9 = arith.constant 9 : index
    %89 = memref.load %arg8[%c9] : memref<16xf32, #tpu.memory_space<smem>>
    %90 = vector.extract_strided_slice %31 {offsets = [16, 0], sizes = [16, 2], strides = [1, 1]} : vector<64x2xf32> to vector<16x2xf32>
    %91 = vector.broadcast %89 : f32 to vector<16x2xf32>
    %92 = arith.mulf %91, %90 : vector<16x2xf32>
    %93 = arith.addf %88, %92 : vector<16x2xf32>
    %c10 = arith.constant 10 : index
    %94 = memref.load %arg8[%c10] : memref<16xf32, #tpu.memory_space<smem>>
    %95 = vector.extract_strided_slice %31 {offsets = [32, 0], sizes = [16, 2], strides = [1, 1]} : vector<64x2xf32> to vector<16x2xf32>
    %96 = vector.broadcast %94 : f32 to vector<16x2xf32>
    %97 = arith.mulf %96, %95 : vector<16x2xf32>
    %98 = arith.addf %93, %97 : vector<16x2xf32>
    %c11 = arith.constant 11 : index
    %99 = memref.load %arg8[%c11] : memref<16xf32, #tpu.memory_space<smem>>
    %100 = vector.extract_strided_slice %31 {offsets = [48, 0], sizes = [16, 2], strides = [1, 1]} : vector<64x2xf32> to vector<16x2xf32>
    %101 = vector.broadcast %99 : f32 to vector<16x2xf32>
    %102 = arith.mulf %101, %100 : vector<16x2xf32>
    %103 = arith.addf %98, %102 : vector<16x2xf32>
    %cst_20 = arith.constant 0.000000e+00 : f32
    %104 = vector.broadcast %cst_20 : f32 to vector<16x2xf32>
    %105 = arith.maximumf %103, %104 : vector<16x2xf32>
    %c32 = arith.constant 32 : index
    %c0_21 = arith.constant 0 : index
    %106 = vector.load %arg11[%c32, %c0_21] : memref<64x2xf32, #tpu.memory_space<vmem>>, vector<16x2xf32>
    tpu.vector_store %arg11[%c32, %c0_21], %105 {strides = array<i32>} : memref<64x2xf32, #tpu.memory_space<vmem>>, vector<16x2xf32>,
    %c3_22 = arith.constant 3 : index
    %107 = memref.load %arg9[%c3_22] : memref<4xf32, #tpu.memory_space<smem>>
    %c12 = arith.constant 12 : index
    %108 = memref.load %arg8[%c12] : memref<16xf32, #tpu.memory_space<smem>>
    %109 = vector.extract_strided_slice %31 {offsets = [0, 0], sizes = [16, 2], strides = [1, 1]} : vector<64x2xf32> to vector<16x2xf32>
    %110 = vector.broadcast %108 : f32 to vector<16x2xf32>
    %111 = arith.mulf %110, %109 : vector<16x2xf32>
    %112 = vector.broadcast %107 : f32 to vector<16x2xf32>
    %113 = arith.addf %112, %111 : vector<16x2xf32>
    %c13 = arith.constant 13 : index
    %114 = memref.load %arg8[%c13] : memref<16xf32, #tpu.memory_space<smem>>
    %115 = vector.extract_strided_slice %31 {offsets = [16, 0], sizes = [16, 2], strides = [1, 1]} : vector<64x2xf32> to vector<16x2xf32>
    %116 = vector.broadcast %114 : f32 to vector<16x2xf32>
    %117 = arith.mulf %116, %115 : vector<16x2xf32>
    %118 = arith.addf %113, %117 : vector<16x2xf32>
    %c14 = arith.constant 14 : index
    %119 = memref.load %arg8[%c14] : memref<16xf32, #tpu.memory_space<smem>>
    %120 = vector.extract_strided_slice %31 {offsets = [32, 0], sizes = [16, 2], strides = [1, 1]} : vector<64x2xf32> to vector<16x2xf32>
    %121 = vector.broadcast %119 : f32 to vector<16x2xf32>
    %122 = arith.mulf %121, %120 : vector<16x2xf32>
    %123 = arith.addf %118, %122 : vector<16x2xf32>
    %c15 = arith.constant 15 : index
    %124 = memref.load %arg8[%c15] : memref<16xf32, #tpu.memory_space<smem>>
    %125 = vector.extract_strided_slice %31 {offsets = [48, 0], sizes = [16, 2], strides = [1, 1]} : vector<64x2xf32> to vector<16x2xf32>
    %126 = vector.broadcast %124 : f32 to vector<16x2xf32>
    %127 = arith.mulf %126, %125 : vector<16x2xf32>
    %128 = arith.addf %123, %127 : vector<16x2xf32>
    %cst_23 = arith.constant 0.000000e+00 : f32
    %129 = vector.broadcast %cst_23 : f32 to vector<16x2xf32>
    %130 = arith.maximumf %128, %129 : vector<16x2xf32>
    %c48 = arith.constant 48 : index
    %c0_24 = arith.constant 0 : index
    %131 = vector.load %arg11[%c48, %c0_24] : memref<64x2xf32, #tpu.memory_space<vmem>>, vector<16x2xf32>
    tpu.vector_store %arg11[%c48, %c0_24], %130 {strides = array<i32>} : memref<64x2xf32, #tpu.memory_space<vmem>>, vector<16x2xf32>,
    %c0_25 = arith.constant 0 : index
    %c0_26 = arith.constant 0 : index
    %132 = vector.load %arg3[%c0_25, %c0_26] : memref<10x64xf32, #tpu.memory_space<vmem>>, vector<10x64xf32>
    %c0_27 = arith.constant 0 : index
    %c0_28 = arith.constant 0 : index
    %133 = vector.load %arg11[%c0_27, %c0_28] : memref<64x2xf32, #tpu.memory_space<vmem>>, vector<64x2xf32>
    %cst_29 = arith.constant dense<0.000000e+00> : vector<10x2xf32>
    %134 = tpu.matmul %132, %133, %cst_29 {dimension_numbers = #tpu.dot_dimension_numbers<[1], [0], [0], [1], [0, 0, 1, 1], [], []>} : vector<10x64xf32>, vector<64x2xf32>, vector<10x2xf32> -> vector<10x2xf32>
    %c0_30 = arith.constant 0 : index
    %c0_31 = arith.constant 0 : index
    %135 = vector.load %arg4[%c0_30, %c0_31] : memref<10x1xf32, #tpu.memory_space<vmem>>, vector<10x1xf32>
    %136 = vector.broadcast %135 : vector<10x1xf32> to vector<10x2xf32>
    %137 = arith.addf %134, %136 : vector<10x2xf32>
    %138 = vector.extract_strided_slice %137 {offsets = [0, 0], sizes = [1, 2], strides = [1, 1]} : vector<10x2xf32> to vector<1x2xf32>
    %139 = vector.extract_strided_slice %137 {offsets = [1, 0], sizes = [1, 2], strides = [1, 1]} : vector<10x2xf32> to vector<1x2xf32>
    %140 = arith.maximumf %138, %139 : vector<1x2xf32>
    %141 = vector.extract_strided_slice %137 {offsets = [2, 0], sizes = [1, 2], strides = [1, 1]} : vector<10x2xf32> to vector<1x2xf32>
    %142 = arith.maximumf %140, %141 : vector<1x2xf32>
    %143 = vector.extract_strided_slice %137 {offsets = [3, 0], sizes = [1, 2], strides = [1, 1]} : vector<10x2xf32> to vector<1x2xf32>
    %144 = arith.maximumf %142, %143 : vector<1x2xf32>
    %145 = vector.extract_strided_slice %137 {offsets = [4, 0], sizes = [1, 2], strides = [1, 1]} : vector<10x2xf32> to vector<1x2xf32>
    %146 = arith.maximumf %144, %145 : vector<1x2xf32>
    %147 = vector.extract_strided_slice %137 {offsets = [5, 0], sizes = [1, 2], strides = [1, 1]} : vector<10x2xf32> to vector<1x2xf32>
    %148 = arith.maximumf %146, %147 : vector<1x2xf32>
    %149 = vector.extract_strided_slice %137 {offsets = [6, 0], sizes = [1, 2], strides = [1, 1]} : vector<10x2xf32> to vector<1x2xf32>
    %150 = arith.maximumf %148, %149 : vector<1x2xf32>
    %151 = vector.extract_strided_slice %137 {offsets = [7, 0], sizes = [1, 2], strides = [1, 1]} : vector<10x2xf32> to vector<1x2xf32>
    %152 = arith.maximumf %150, %151 : vector<1x2xf32>
    %153 = vector.extract_strided_slice %137 {offsets = [8, 0], sizes = [1, 2], strides = [1, 1]} : vector<10x2xf32> to vector<1x2xf32>
    %154 = arith.maximumf %152, %153 : vector<1x2xf32>
    %155 = vector.extract_strided_slice %137 {offsets = [9, 0], sizes = [1, 2], strides = [1, 1]} : vector<10x2xf32> to vector<1x2xf32>
    %156 = arith.maximumf %154, %155 : vector<1x2xf32>
    %157 = vector.broadcast %156 : vector<1x2xf32> to vector<10x2xf32>
    %158 = arith.subf %137, %157 : vector<10x2xf32>
    %159 = math.exp %158 : vector<10x2xf32>
    %160 = vector.extract_strided_slice %159 {offsets = [0, 0], sizes = [1, 2], strides = [1, 1]} : vector<10x2xf32> to vector<1x2xf32>
    %161 = vector.extract_strided_slice %159 {offsets = [1, 0], sizes = [1, 2], strides = [1, 1]} : vector<10x2xf32> to vector<1x2xf32>
    %162 = arith.addf %160, %161 : vector<1x2xf32>
    %163 = vector.extract_strided_slice %159 {offsets = [2, 0], sizes = [1, 2], strides = [1, 1]} : vector<10x2xf32> to vector<1x2xf32>
    %164 = arith.addf %162, %163 : vector<1x2xf32>
    %165 = vector.extract_strided_slice %159 {offsets = [3, 0], sizes = [1, 2], strides = [1, 1]} : vector<10x2xf32> to vector<1x2xf32>
    %166 = arith.addf %164, %165 : vector<1x2xf32>
    %167 = vector.extract_strided_slice %159 {offsets = [4, 0], sizes = [1, 2], strides = [1, 1]} : vector<10x2xf32> to vector<1x2xf32>
    %168 = arith.addf %166, %167 : vector<1x2xf32>
    %169 = vector.extract_strided_slice %159 {offsets = [5, 0], sizes = [1, 2], strides = [1, 1]} : vector<10x2xf32> to vector<1x2xf32>
    %170 = arith.addf %168, %169 : vector<1x2xf32>
    %171 = vector.extract_strided_slice %159 {offsets = [6, 0], sizes = [1, 2], strides = [1, 1]} : vector<10x2xf32> to vector<1x2xf32>
    %172 = arith.addf %170, %171 : vector<1x2xf32>
    %173 = vector.extract_strided_slice %159 {offsets = [7, 0], sizes = [1, 2], strides = [1, 1]} : vector<10x2xf32> to vector<1x2xf32>
    %174 = arith.addf %172, %173 : vector<1x2xf32>
    %175 = vector.extract_strided_slice %159 {offsets = [8, 0], sizes = [1, 2], strides = [1, 1]} : vector<10x2xf32> to vector<1x2xf32>
    %176 = arith.addf %174, %175 : vector<1x2xf32>
    %177 = vector.extract_strided_slice %159 {offsets = [9, 0], sizes = [1, 2], strides = [1, 1]} : vector<10x2xf32> to vector<1x2xf32>
    %178 = arith.addf %176, %177 : vector<1x2xf32>
    %179 = tpu.reciprocal %178 {approx = true} : vector<1x2xf32> -> vector<1x2xf32>
    %180 = arith.mulf %178, %179 : vector<1x2xf32>
    %cst_32 = arith.constant 2.000000e+00 : f32
    %181 = vector.broadcast %cst_32 : f32 to vector<1x2xf32>
    %182 = arith.subf %181, %180 : vector<1x2xf32>
    %183 = arith.mulf %179, %182 : vector<1x2xf32>
    %184 = vector.broadcast %183 : vector<1x2xf32> to vector<10x2xf32>
    %185 = arith.mulf %159, %184 : vector<10x2xf32>
    %c0_33 = arith.constant 0 : index
    %c0_34 = arith.constant 0 : index
    %186 = vector.load %arg10[%c0_33, %c0_34] : memref<10x2xf32, #tpu.memory_space<vmem>>, vector<10x2xf32>
    tpu.vector_store %arg10[%c0_33, %c0_34], %185 {strides = array<i32>} : memref<10x2xf32, #tpu.memory_space<vmem>>, vector<10x2xf32>,
    return
  }
  func.func @transform_0(%arg0: i32) -> (i32, i32) {
    %c0_i32 = arith.constant 0 : i32
    %c0_i32_0 = arith.constant 0 : i32
    return %arg0, %c0_i32 : i32, i32
  }
  func.func @transform_1(%arg0: i32) -> (i32, i32) {
    %c0_i32 = arith.constant 0 : i32
    %c0_i32_0 = arith.constant 0 : i32
    %c0_i32_1 = arith.constant 0 : i32
    return %c0_i32, %c0_i32_0 : i32, i32
  }
  func.func @transform_2(%arg0: i32) -> (i32, i32) {
    %c0_i32 = arith.constant 0 : i32
    %c0_i32_0 = arith.constant 0 : i32
    %c0_i32_1 = arith.constant 0 : i32
    return %c0_i32, %c0_i32_0 : i32, i32
  }
  func.func @transform_3(%arg0: i32) -> (i32, i32) {
    %c0_i32 = arith.constant 0 : i32
    %c0_i32_0 = arith.constant 0 : i32
    %c0_i32_1 = arith.constant 0 : i32
    return %c0_i32, %c0_i32_0 : i32, i32
  }
  func.func @transform_4(%arg0: i32) -> i32 {
    %c0_i32 = arith.constant 0 : i32
    %c0_i32_0 = arith.constant 0 : i32
    return %c0_i32 : i32
  }
  func.func @transform_5(%arg0: i32) -> i32 {
    %c0_i32 = arith.constant 0 : i32
    %c0_i32_0 = arith.constant 0 : i32
    return %c0_i32 : i32
  }
  func.func @transform_6(%arg0: i32) -> i32 {
    %c0_i32 = arith.constant 0 : i32
    %c0_i32_0 = arith.constant 0 : i32
    return %c0_i32 : i32
  }
  func.func @transform_7(%arg0: i32) -> i32 {
    %c0_i32 = arith.constant 0 : i32
    %c0_i32_0 = arith.constant 0 : i32
    return %c0_i32 : i32
  }
  func.func @transform_8(%arg0: i32) -> i32 {
    %c0_i32 = arith.constant 0 : i32
    %c0_i32_0 = arith.constant 0 : i32
    return %c0_i32 : i32
  }
  func.func @transform_9(%arg0: i32) -> (i32, i32) {
    %c0_i32 = arith.constant 0 : i32
    %c0_i32_0 = arith.constant 0 : i32
    return %c0_i32, %arg0 : i32, i32
  }
}

</mosaic_0001>

<llo_original>
// kernel: convnet_forward.1
$region0: #{convnet_forward.1}
  #allocation0 [shape = 'u32[]', space=smem, size = 0x4, offset = 0x4, fixed_abs, tag = 'smem constant byte address 0x4 - core index']
  #allocation1 [shape = 'u32[144,128]{1,0:T(1,128)}', space=vmem, size = 0x12000, scoped, tag = 'internal scratch']
  #allocation2 [shape = 'f32[64,2]{1,0:T(8,128)}', space=vmem, size = 0x8000, scoped, tag = 'scratch operand']
  #allocation3 [shape = 'f32[1]{0:T(128)S(6)}', space=smem, size = 0x200, scoped, tag = 'scoped memory for convnet_forward.1']
  #allocation4 [shape = 'f32[1]{0:T(128)S(6)}', space=smem, size = 0x200, scoped, tag = 'scoped memory for convnet_forward.1']
  %s0 = inlined_call_operand.vmem [shape: f32[2,784], index: 0, kind: input, shape index: {}]
  %s1 = inlined_call_operand.vmem [shape: f32[256,784], index: 1, kind: input, shape index: {}]
  %s2 = inlined_call_operand.vmem [shape: f32[10,64], index: 2, kind: input, shape index: {}]
  %s3 = inlined_call_operand.vmem [shape: f32[10,1], index: 3, kind: input, shape index: {}]
  %s4 = inlined_call_operand.<no memory space> [shape: f32[1], index: 4, kind: input, shape index: {}]
  %s5 = inlined_call_operand.vmem [shape: f32[4], index: 5, kind: input, shape index: {}]
  %s6 = inlined_call_operand.<no memory space> [shape: f32[1], index: 6, kind: input, shape index: {}]
  %s7 = inlined_call_operand.vmem [shape: f32[16], index: 7, kind: input, shape index: {}]
  %s8 = inlined_call_operand.vmem [shape: f32[4], index: 8, kind: input, shape index: {}]
  %s9 = inlined_call_operand.vmem [shape: f32[10,2], index: 9, kind: output, shape index: {}]
  %s10 = sld [smem:[#allocation0]]
  $region58: #{convnet_forward.1} parent=0
    _
  %s12 = ssub.s32 1, %s10
  %s13 = scalar_select 0, %s12, %s10
  %14 = sst [smem:[#allocation3]] %s4
  %15 = sst [smem:[#allocation4]] %s6
  $region1: #{convnet_forward.1} parent=0
    #allocation5 [shape = 'u8[512]{0}', space=smem, size = 0x200, scoped, tag = 'input window, operand 5, single buffered']
    #allocation6 [shape = 's32[1]{0}', space=sflag, size = 0x4, scoped, tag = 'scoped memory for convnet_forward.1']
    #allocation7 [shape = 'u8[512]{0}', space=smem, size = 0x200, scoped, tag = 'input window, operand 7, single buffered']
    #allocation8 [shape = 's32[1]{0}', space=sflag, size = 0x4, scoped, tag = 'scoped memory for convnet_forward.1']
    #allocation9 [shape = 'u8[512]{0}', space=smem, size = 0x200, scoped, tag = 'input window, operand 8, single buffered']
    %16 = vsyncpa [#allocation6], 0
    %17 = vsyncpa [#allocation8], 0
    // Predicated region
    $region2: #{convnet_forward.1} parent=1 // pred_check
      _
    $region3: #{convnet_forward.1} parent=1 // pred_check_branch
      %19 = sbr.rel (0) target = $region5
    $region4: #{convnet_forward.1} parent=1 // pred_region
      _
    $region5: #{convnet_forward.1} parent=1 // pred_fallthru
      _
    // Predicated region
    $region6: #{convnet_forward.1} parent=1 // pred_check
      _
    $region7: #{convnet_forward.1} parent=1 // pred_check_branch
      %21 = sbr.rel (0) target = $region9
    $region8: #{convnet_forward.1} parent=1 // pred_region
      _
    $region9: #{convnet_forward.1} parent=1 // pred_fallthru
      _
    // Predicated region
    $region10: #{convnet_forward.1} parent=1 // pred_check
      _
    $region11: #{convnet_forward.1} parent=1 // pred_check_branch
      %23 = sbr.rel (0) target = $region13
    $region12: #{convnet_forward.1} parent=1 // pred_region
      _
    $region13: #{convnet_forward.1} parent=1 // pred_fallthru
      _
    // Predicated region
    $region14: #{convnet_forward.1} parent=1 // pred_check
      _
    $region15: #{convnet_forward.1} parent=1 // pred_check_branch
      %25 = sbr.rel (0) target = $region17
    $region16: #{convnet_forward.1} parent=1 // pred_region
      _
    $region17: #{convnet_forward.1} parent=1 // pred_fallthru
      _
    // Predicated region
    $region18: #{convnet_forward.1} parent=1 // pred_check
      _
    $region19: #{convnet_forward.1} parent=1 // pred_check_branch
      %27 = sbr.rel (0) target = $region21
    $region20: #{convnet_forward.1} parent=1 // pred_region
      _
    $region21: #{convnet_forward.1} parent=1 // pred_fallthru
      _
    // Predicated region
    $region22: #{convnet_forward.1} parent=1 // pred_check
      _
    $region23: #{convnet_forward.1} parent=1 // pred_check_branch
      %29 = sbr.rel (0) target = $region25
    $region24: #{convnet_forward.1} parent=1 // pred_region
      %s31 = ssub.s32 16, 16
      %32 = vsyncadd [#allocation6], %s31
      %s34 = sshll.u32 %s5, 4
      %s35 = int_to_ptr.vmem [resolvable:$true] %s34
      %37 = dma.vmem_to_smem %s35, 16, [#allocation5], [#allocation6]
    $region25: #{convnet_forward.1} parent=1 // pred_fallthru
      _
    // Predicated region
    $region26: #{convnet_forward.1} parent=1 // pred_check
      _
    $region27: #{convnet_forward.1} parent=1 // pred_check_branch
      %39 = sbr.rel (0) target = $region29
    $region28: #{convnet_forward.1} parent=1 // pred_region
      _
    $region29: #{convnet_forward.1} parent=1 // pred_fallthru
      _
    // Predicated region
    $region30: #{convnet_forward.1} parent=1 // pred_check
      _
    $region31: #{convnet_forward.1} parent=1 // pred_check_branch
      %41 = sbr.rel (0) target = $region33
    $region32: #{convnet_forward.1} parent=1 // pred_region
      %s43 = ssub.s32 16, 16
      %44 = vsyncadd [#allocation8], %s43
      %s46 = sshll.u32 %s7, 4
      %s47 = int_to_ptr.vmem [resolvable:$true] %s46
      %49 = dma.vmem_to_smem %s47, 16, [#allocation7], [#allocation8]
    $region33: #{convnet_forward.1} parent=1 // pred_fallthru
      _
    // Predicated region
    $region34: #{convnet_forward.1} parent=1 // pred_check
      _
    $region35: #{convnet_forward.1} parent=1 // pred_check_branch
      %51 = sbr.rel (0) target = $region37
    $region36: #{convnet_forward.1} parent=1 // pred_region
      %s53 = ssub.s32 16, 16
      %54 = vsyncadd [#allocation8], %s53
      %s56 = sshll.u32 %s8, 4
      %s57 = int_to_ptr.vmem [resolvable:$true] %s56
      %59 = dma.vmem_to_smem %s57, 16, [#allocation9], [#allocation8]
    $region37: #{convnet_forward.1} parent=1 // pred_fallthru
      _
    // Predicated region
    $region38: #{convnet_forward.1} parent=1 // pred_check
      _
    $region39: #{convnet_forward.1} parent=1 // pred_check_branch
      %61 = sbr.rel (0) target = $region41
    $region40: #{convnet_forward.1} parent=1 // pred_region
      %62 = dma.done [#allocation6], 16
    $region41: #{convnet_forward.1} parent=1 // pred_fallthru
      _
    // Predicated region
    $region42: #{convnet_forward.1} parent=1 // pred_check
      _
    $region43: #{convnet_forward.1} parent=1 // pred_check_branch
      %64 = sbr.rel (0) target = $region45
    $region44: #{convnet_forward.1} parent=1 // pred_region
      %65 = dma.done [#allocation8], 16
    $region45: #{convnet_forward.1} parent=1 // pred_fallthru
      _
    // Predicated region
    $region46: #{convnet_forward.1} parent=1 // pred_check
      _
    $region47: #{convnet_forward.1} parent=1 // pred_check_branch
      %67 = sbr.rel (0) target = $region49
    $region48: #{convnet_forward.1} parent=1 // pred_region
      %68 = dma.done [#allocation8], 16
    $region49: #{convnet_forward.1} parent=1 // pred_fallthru
      _
    %69 = sfence
    %v70 = vld [vmem:[%s1] sm:$0xff]
    %v71 = vld [vmem:[%s1 + $0x8] sm:$0xff]
    %v72 = vld [vmem:[%s1 + $0x10] sm:$0xff]
    %v73 = vld [vmem:[%s1 + $0x18] sm:$0xff]
    %v74 = vld [vmem:[%s1 + $0x20] sm:$0xff]
    %v75 = vld [vmem:[%s1 + $0x28] sm:$0xff]
    %v76 = vld [vmem:[%s1 + $0x30] sm:$0xff]
    %v77 = vld [vmem:[%s1 + $0x38] sm:$0xff]
    %v78 = vld [vmem:[%s1 + $0x40] sm:$0xff]
    %v79 = vld [vmem:[%s1 + $0x48] sm:$0xff]
    %v80 = vld [vmem:[%s1 + $0x50] sm:$0xff]
    %v81 = vld [vmem:[%s1 + $0x58] sm:$0xff]
    %v82 = vld [vmem:[%s1 + $0x60] sm:$0xff]
    %v83 = vld [vmem:[%s1 + $0x68] sm:$0xff]
    %v84 = vld [vmem:[%s1 + $0x70] sm:$0xff]
    %v85 = vld [vmem:[%s1 + $0x78] sm:$0xff]
    %v86 = vld [vmem:[%s1 + $0x80] sm:$0xff]
    %v87 = vld [vmem:[%s1 + $0x88] sm:$0xff]
    %v88 = vld [vmem:[%s1 + $0x90] sm:$0xff]
    %v89 = vld [vmem:[%s1 + $0x98] sm:$0xff]
    %v90 = vld [vmem:[%s1 + $0xa0] sm:$0xff]
    %v91 = vld [vmem:[%s1 + $0xa8] sm:$0xff]
    %v92 = vld [vmem:[%s1 + $0xb0] sm:$0xff]
    %v93 = vld [vmem:[%s1 + $0xb8] sm:$0xff]
    %v94 = vld [vmem:[%s1 + $0xc0] sm:$0xff]
    %v95 = vld [vmem:[%s1 + $0xc8] sm:$0xff]
    %v96 = vld [vmem:[%s1 + $0xd0] sm:$0xff]
    %v97 = vld [vmem:[%s1 + $0xd8] sm:$0xff]
    %v98 = vld [vmem:[%s1 + $0xe0] sm:$0xff]
    %v99 = vld [vmem:[%s1 + $0xe8] sm:$0xff]
    %v100 = vld [vmem:[%s1 + $0xf0] sm:$0xff]
    %v101 = vld [vmem:[%s1 + $0xf8] sm:$0xff]
    %v102 = vld [vmem:[%s1 + $0x100] sm:$0xff]
    %v103 = vld [vmem:[%s1 + $0x108] sm:$0xff]
    %v104 = vld [vmem:[%s1 + $0x110] sm:$0xff]
    %v105 = vld [vmem:[%s1 + $0x118] sm:$0xff]
    %v106 = vld [vmem:[%s1 + $0x120] sm:$0xff]
    %v107 = vld [vmem:[%s1 + $0x128] sm:$0xff]
    %v108 = vld [vmem:[%s1 + $0x130] sm:$0xff]
    %v109 = vld [vmem:[%s1 + $0x138] sm:$0xff]
    %v110 = vld [vmem:[%s1 + $0x140] sm:$0xff]
    %v111 = vld [vmem:[%s1 + $0x148] sm:$0xff]
    %v112 = vld [vmem:[%s1 + $0x150] sm:$0xff]
    %v113 = vld [vmem:[%s1 + $0x158] sm:$0xff]
    %v114 = vld [vmem:[%s1 + $0x160] sm:$0xff]
    %v115 = vld [vmem:[%s1 + $0x168] sm:$0xff]
    %v116 = vld [vmem:[%s1 + $0x170] sm:$0xff]
    %v117 = vld [vmem:[%s1 + $0x178] sm:$0xff]
    %v118 = vld [vmem:[%s1 + $0x180] sm:$0xff]
    %v119 = vld [vmem:[%s1 + $0x188] sm:$0xff]
    %v120 = vld [vmem:[%s1 + $0x190] sm:$0xff]
    %v121 = vld [vmem:[%s1 + $0x198] sm:$0xff]
    %v122 = vld [vmem:[%s1 + $0x1a0] sm:$0xff]
    %v123 = vld [vmem:[%s1 + $0x1a8] sm:$0xff]
    %v124 = vld [vmem:[%s1 + $0x1b0] sm:$0xff]
    %v125 = vld [vmem:[%s1 + $0x1b8] sm:$0xff]
    %v126 = vld [vmem:[%s1 + $0x1c0] sm:$0xff]
    %v127 = vld [vmem:[%s1 + $0x1c8] sm:$0xff]
    %v128 = vld [vmem:[%s1 + $0x1d0] sm:$0xff]
    %v129 = vld [vmem:[%s1 + $0x1d8] sm:$0xff]
    %v130 = vld [vmem:[%s1 + $0x1e0] sm:$0xff]
    %v131 = vld [vmem:[%s1 + $0x1e8] sm:$0xff]
    %v132 = vld [vmem:[%s1 + $0x1f0] sm:$0xff]
    %v133 = vld [vmem:[%s1 + $0x1f8] sm:$0xff]
    %v134 = vld [vmem:[%s1 + $0x200] sm:$0xff]
    %v135 = vld [vmem:[%s1 + $0x208] sm:$0xff]
    %v136 = vld [vmem:[%s1 + $0x210] sm:$0xff]
    %v137 = vld [vmem:[%s1 + $0x218] sm:$0xff]
    %v138 = vld [vmem:[%s1 + $0x220] sm:$0xff]
    %v139 = vld [vmem:[%s1 + $0x228] sm:$0xff]
    %v140 = vld [vmem:[%s1 + $0x230] sm:$0xff]
    %v141 = vld [vmem:[%s1 + $0x238] sm:$0xff]
    %v142 = vld [vmem:[%s1 + $0x240] sm:$0xff]
    %v143 = vld [vmem:[%s1 + $0x248] sm:$0xff]
    %v144 = vld [vmem:[%s1 + $0x250] sm:$0xff]
    %v145 = vld [vmem:[%s1 + $0x258] sm:$0xff]
    %v146 = vld [vmem:[%s1 + $0x260] sm:$0xff]
    %v147 = vld [vmem:[%s1 + $0x268] sm:$0xff]
    %v148 = vld [vmem:[%s1 + $0x270] sm:$0xff]
    %v149 = vld [vmem:[%s1 + $0x278] sm:$0xff]
    %v150 = vld [vmem:[%s1 + $0x280] sm:$0xff]
    %v151 = vld [vmem:[%s1 + $0x288] sm:$0xff]
    %v152 = vld [vmem:[%s1 + $0x290] sm:$0xff]
    %v153 = vld [vmem:[%s1 + $0x298] sm:$0xff]
    %v154 = vld [vmem:[%s1 + $0x2a0] sm:$0xff]
    %v155 = vld [vmem:[%s1 + $0x2a8] sm:$0xff]
    %v156 = vld [vmem:[%s1 + $0x2b0] sm:$0xff]
    %v157 = vld [vmem:[%s1 + $0x2b8] sm:$0xff]
    %v158 = vld [vmem:[%s1 + $0x2c0] sm:$0xff]
    %v159 = vld [vmem:[%s1 + $0x2c8] sm:$0xff]
    %v160 = vld [vmem:[%s1 + $0x2d0] sm:$0xff]
    %v161 = vld [vmem:[%s1 + $0x2d8] sm:$0xff]
    %v162 = vld [vmem:[%s1 + $0x2e0] sm:$0xff]
    %v163 = vld [vmem:[%s1 + $0x2e8] sm:$0xff]
    %v164 = vld [vmem:[%s1 + $0x2f0] sm:$0xff]
    %v165 = vld [vmem:[%s1 + $0x2f8] sm:$0xff]
    %v166 = vld [vmem:[%s1 + $0x300] sm:$0xff]
    %v167 = vld [vmem:[%s1 + $0x308] sm:$0xff]
    %v168 = vld [vmem:[%s1 + $0x310] sm:$0xff]
    %v169 = vld [vmem:[%s1 + $0x318] sm:$0xff]
    %v170 = vld [vmem:[%s1 + $0x320] sm:$0xff]
    %v171 = vld [vmem:[%s1 + $0x328] sm:$0xff]
    %v172 = vld [vmem:[%s1 + $0x330] sm:$0xff]
    %v173 = vld [vmem:[%s1 + $0x338] sm:$0xff]
    %v174 = vld [vmem:[%s1 + $0x340] sm:$0xff]
    %v175 = vld [vmem:[%s1 + $0x348] sm:$0xff]
    %v176 = vld [vmem:[%s1 + $0x350] sm:$0xff]
    %v177 = vld [vmem:[%s1 + $0x358] sm:$0xff]
    %v178 = vld [vmem:[%s1 + $0x360] sm:$0xff]
    %v179 = vld [vmem:[%s1 + $0x368] sm:$0xff]
    %v180 = vld [vmem:[%s1 + $0x370] sm:$0xff]
    %v181 = vld [vmem:[%s1 + $0x378] sm:$0xff]
    %v182 = vld [vmem:[%s1 + $0x380] sm:$0xff]
    %v183 = vld [vmem:[%s1 + $0x388] sm:$0xff]
    %v184 = vld [vmem:[%s1 + $0x390] sm:$0xff]
    %v185 = vld [vmem:[%s1 + $0x398] sm:$0xff]
    %v186 = vld [vmem:[%s1 + $0x3a0] sm:$0xff]
    %v187 = vld [vmem:[%s1 + $0x3a8] sm:$0xff]
    %v188 = vld [vmem:[%s1 + $0x3b0] sm:$0xff]
    %v189 = vld [vmem:[%s1 + $0x3b8] sm:$0xff]
    %v190 = vld [vmem:[%s1 + $0x3c0] sm:$0xff]
    %v191 = vld [vmem:[%s1 + $0x3c8] sm:$0xff]
    %v192 = vld [vmem:[%s1 + $0x3d0] sm:$0xff]
    %v193 = vld [vmem:[%s1 + $0x3d8] sm:$0xff]
    %v194 = vld [vmem:[%s1 + $0x3e0] sm:$0xff]
    %v195 = vld [vmem:[%s1 + $0x3e8] sm:$0xff]
    %v196 = vld [vmem:[%s1 + $0x3f0] sm:$0xff]
    %v197 = vld [vmem:[%s1 + $0x3f8] sm:$0xff]
    %v198 = vld [vmem:[%s1 + $0x400] sm:$0xff]
    %v199 = vld [vmem:[%s1 + $0x408] sm:$0xff]
    %v200 = vld [vmem:[%s1 + $0x410] sm:$0xff]
    %v201 = vld [vmem:[%s1 + $0x418] sm:$0xff]
    %v202 = vld [vmem:[%s1 + $0x420] sm:$0xff]
    %v203 = vld [vmem:[%s1 + $0x428] sm:$0xff]
    %v204 = vld [vmem:[%s1 + $0x430] sm:$0xff]
    %v205 = vld [vmem:[%s1 + $0x438] sm:$0xff]
    %v206 = vld [vmem:[%s1 + $0x440] sm:$0xff]
    %v207 = vld [vmem:[%s1 + $0x448] sm:$0xff]
    %v208 = vld [vmem:[%s1 + $0x450] sm:$0xff]
    %v209 = vld [vmem:[%s1 + $0x458] sm:$0xff]
    %v210 = vld [vmem:[%s1 + $0x460] sm:$0xff]
    %v211 = vld [vmem:[%s1 + $0x468] sm:$0xff]
    %v212 = vld [vmem:[%s1 + $0x470] sm:$0xff]
    %v213 = vld [vmem:[%s1 + $0x478] sm:$0xff]
    %v214 = vld [vmem:[%s1 + $0x480] sm:$0xff]
    %v215 = vld [vmem:[%s1 + $0x488] sm:$0xff]
    %v216 = vld [vmem:[%s1 + $0x490] sm:$0xff]
    %v217 = vld [vmem:[%s1 + $0x498] sm:$0xff]
    %v218 = vld [vmem:[%s1 + $0x4a0] sm:$0xff]
    %v219 = vld [vmem:[%s1 + $0x4a8] sm:$0xff]
    %v220 = vld [vmem:[%s1 + $0x4b0] sm:$0xff]
    %v221 = vld [vmem:[%s1 + $0x4b8] sm:$0xff]
    %v222 = vld [vmem:[%s1 + $0x4c0] sm:$0xff]
    %v223 = vld [vmem:[%s1 + $0x4c8] sm:$0xff]
    %v224 = vld [vmem:[%s1 + $0x4d0] sm:$0xff]
    %v225 = vld [vmem:[%s1 + $0x4d8] sm:$0xff]
    %v226 = vld [vmem:[%s1 + $0x4e0] sm:$0xff]
    %v227 = vld [vmem:[%s1 + $0x4e8] sm:$0xff]
    %v228 = vld [vmem:[%s1 + $0x4f0] sm:$0xff]
    %v229 = vld [vmem:[%s1 + $0x4f8] sm:$0xff]
    %v230 = vld [vmem:[%s1 + $0x500] sm:$0xff]
    %v231 = vld [vmem:[%s1 + $0x508] sm:$0xff]
    %v232 = vld [vmem:[%s1 + $0x510] sm:$0xff]
    %v233 = vld [vmem:[%s1 + $0x518] sm:$0xff]
    %v234 = vld [vmem:[%s1 + $0x520] sm:$0xff]
    %v235 = vld [vmem:[%s1 + $0x528] sm:$0xff]
    %v236 = vld [vmem:[%s1 + $0x530] sm:$0xff]
    %v237 = vld [vmem:[%s1 + $0x538] sm:$0xff]
    %v238 = vld [vmem:[%s1 + $0x540] sm:$0xff]
    %v239 = vld [vmem:[%s1 + $0x548] sm:$0xff]
    %v240 = vld [vmem:[%s1 + $0x550] sm:$0xff]
    %v241 = vld [vmem:[%s1 + $0x558] sm:$0xff]
    %v242 = vld [vmem:[%s1 + $0x560] sm:$0xff]
    %v243 = vld [vmem:[%s1 + $0x568] sm:$0xff]
    %v244 = vld [vmem:[%s1 + $0x570] sm:$0xff]
    %v245 = vld [vmem:[%s1 + $0x578] sm:$0xff]
    %v246 = vld [vmem:[%s1 + $0x580] sm:$0xff]
    %v247 = vld [vmem:[%s1 + $0x588] sm:$0xff]
    %v248 = vld [vmem:[%s1 + $0x590] sm:$0xff]
    %v249 = vld [vmem:[%s1 + $0x598] sm:$0xff]
    %v250 = vld [vmem:[%s1 + $0x5a0] sm:$0xff]
    %v251 = vld [vmem:[%s1 + $0x5a8] sm:$0xff]
    %v252 = vld [vmem:[%s1 + $0x5b0] sm:$0xff]
    %v253 = vld [vmem:[%s1 + $0x5b8] sm:$0xff]
    %v254 = vld [vmem:[%s1 + $0x5c0] sm:$0xff]
    %v255 = vld [vmem:[%s1 + $0x5c8] sm:$0xff]
    %v256 = vld [vmem:[%s1 + $0x5d0] sm:$0xff]
    %v257 = vld [vmem:[%s1 + $0x5d8] sm:$0xff]
    %v258 = vld [vmem:[%s1 + $0x5e0] sm:$0xff]
    %v259 = vld [vmem:[%s1 + $0x5e8] sm:$0xff]
    %v260 = vld [vmem:[%s1 + $0x5f0] sm:$0xff]
    %v261 = vld [vmem:[%s1 + $0x5f8] sm:$0xff]
    %v262 = vld [vmem:[%s1 + $0x600] sm:$0xff]
    %v263 = vld [vmem:[%s1 + $0x608] sm:$0xff]
    %v264 = vld [vmem:[%s1 + $0x610] sm:$0xff]
    %v265 = vld [vmem:[%s1 + $0x618] sm:$0xff]
    %v266 = vld [vmem:[%s1 + $0x620] sm:$0xff]
    %v267 = vld [vmem:[%s1 + $0x628] sm:$0xff]
    %v268 = vld [vmem:[%s1 + $0x630] sm:$0xff]
    %v269 = vld [vmem:[%s1 + $0x638] sm:$0xff]
    %v270 = vld [vmem:[%s1 + $0x640] sm:$0xff]
    %v271 = vld [vmem:[%s1 + $0x648] sm:$0xff]
    %v272 = vld [vmem:[%s1 + $0x650] sm:$0xff]
    %v273 = vld [vmem:[%s1 + $0x658] sm:$0xff]
    %v274 = vld [vmem:[%s1 + $0x660] sm:$0xff]
    %v275 = vld [vmem:[%s1 + $0x668] sm:$0xff]
    %v276 = vld [vmem:[%s1 + $0x670] sm:$0xff]
    %v277 = vld [vmem:[%s1 + $0x678] sm:$0xff]
    %v278 = vld [vmem:[%s1 + $0x680] sm:$0xff]
    %v279 = vld [vmem:[%s1 + $0x688] sm:$0xff]
    %v280 = vld [vmem:[%s1 + $0x690] sm:$0xff]
    %v281 = vld [vmem:[%s1 + $0x698] sm:$0xff]
    %v282 = vld [vmem:[%s1 + $0x6a0] sm:$0xff]
    %v283 = vld [vmem:[%s1 + $0x6a8] sm:$0xff]
    %v284 = vld [vmem:[%s1 + $0x6b0] sm:$0xff]
    %v285 = vld [vmem:[%s1 + $0x6b8] sm:$0xff]
    %v286 = vld [vmem:[%s1 + $0x6c0] sm:$0xff]
    %v287 = vld [vmem:[%s1 + $0x6c8] sm:$0xff]
    %v288 = vld [vmem:[%s1 + $0x6d0] sm:$0xff]
    %v289 = vld [vmem:[%s1 + $0x6d8] sm:$0xff]
    %v290 = vld [vmem:[%s1 + $0x6e0] sm:$0xff]
    %v291 = vld [vmem:[%s1 + $0x6e8] sm:$0xff]
    %v292 = vld [vmem:[%s1 + $0x6f0] sm:$0xff]
    %v293 = vld [vmem:[%s1 + $0x6f8] sm:$0xff]
    %v294 = vld [vmem:[%s0] sm:$0xff]
    %v295 = vld [vmem:[%s0 + $0x8] sm:$0x3f]
    %s296 = sld [smem:[#allocation3]]
    %v297 = vstv %s296
    %v300 = vcombine.high %v294, %v294
    %v302 = vunpack.c.l.s4 1983009808
    %v303 = vunpack.c.0.s8 %v302
    %v304 = vlaneseq
    %v305 = vshrl.u32 %v304, 7
    %v306 = vsub.s32 %v303, %v305
    %v307 = vrot.slane %v294, %v306
    %v309 = vunpack.c.l.s4 1983009808
    %v310 = vunpack.c.0.s8 %v309
    %v311 = vlaneseq
    %v312 = vshrl.u32 %v311, 7
    %v313 = vsub.s32 %v310, %v312
    %v314 = vrot.slane %v300, %v313
    %v315 = vcombine.high %v307, %v307
    %v316 = vcombine.high %v314, %v314
    %v317 = vcombine.high %v295, %v295
    %v319 = vunpack.c.l.s4 1983009808
    %v320 = vunpack.c.0.s8 %v319
    %v321 = vlaneseq
    %v322 = vshrl.u32 %v321, 7
    %v323 = vsub.s32 %v320, %v322
    %v324 = vrot.slane %v295, %v323
    %v326 = vunpack.c.l.s4 1983009808
    %v327 = vunpack.c.0.s8 %v326
    %v328 = vlaneseq
    %v329 = vshrl.u32 %v328, 7
    %v330 = vsub.s32 %v327, %v329
    %v331 = vrot.slane %v317, %v330
    %v332 = vcombine.high %v324, %v324
    %vm339 = vcmask 130048
    %v341 = vsel %vm339, %v76, 0
    %v344 = vsel %vm339, %v83, 0
    %v347 = vsel %vm339, %v90, 0
    %v350 = vsel %vm339, %v97, 0
    %v353 = vsel %vm339, %v104, 0
    %v356 = vsel %vm339, %v111, 0
    %v359 = vsel %vm339, %v118, 0
    %v362 = vsel %vm339, %v125, 0
    %v365 = vsel %vm339, %v132, 0
    %v368 = vsel %vm339, %v139, 0
    %v371 = vsel %vm339, %v146, 0
    %v374 = vsel %vm339, %v153, 0
    %v377 = vsel %vm339, %v160, 0
    %v380 = vsel %vm339, %v167, 0
    %v383 = vsel %vm339, %v174, 0
    %v386 = vsel %vm339, %v181, 0
    %v389 = vsel %vm339, %v188, 0
    %v392 = vsel %vm339, %v195, 0
    %v395 = vsel %vm339, %v202, 0
    %v398 = vsel %vm339, %v209, 0
    %v401 = vsel %vm339, %v216, 0
    %v404 = vsel %vm339, %v223, 0
    %v407 = vsel %vm339, %v230, 0
    %v410 = vsel %vm339, %v237, 0
    %v413 = vsel %vm339, %v244, 0
    %v416 = vsel %vm339, %v251, 0
    %v419 = vsel %vm339, %v258, 0
    %v422 = vsel %vm339, %v265, 0
    %v425 = vsel %vm339, %v272, 0
    %v428 = vsel %vm339, %v279, 0
    %v431 = vsel %vm339, %v286, 0
    %v434 = vsel %vm339, %v293, 0
    %v436 = vsel %vm339, %v331, 0
    %438 = vmatprep.subr.mxu0 %v315
    %439 = vmatpush1.xpose.msra.mxu0 %v307
    %440 = vmatprep.subr.mxu0 0.0
    %441 = vmatpush1.xpose.msra.mxu0 0.0
    %442 = vmatprep.subr.mxu0 0.0
    %443 = vmatpush1.xpose.msra.mxu0 0.0
    %444 = vmatprep.subr.mxu0 0.0
    %445 = vmatpush1.xpose.msra.mxu0 0.0
    %446 = vmatprep.subr.mxu0 0.0
    %447 = vmatpush1.xpose.msra.mxu0 0.0
    %448 = vmatprep.subr.mxu0 0.0
    %449 = vmatpush1.xpose.msra.mxu0 0.0
    %450 = vmatprep.subr.mxu0 0.0
    %451 = vmatpush1.xpose.msra.mxu0 0.0
    %452 = vmatprep.subr.mxu0 0.0
    %453 = vmatpush1.xpose.msra.mxu0 0.0
    %454 = vmatprep.subr.mxu0 0.0
    %455 = vmatpush1.xpose.msra.mxu0 0.0
    %456 = vmatprep.subr.mxu0 0.0
    %457 = vmatpush1.xpose.msra.mxu0 0.0
    %458 = vmatprep.subr.mxu0 0.0
    %459 = vmatpush1.xpose.msra.mxu0 0.0
    %460 = vmatprep.subr.mxu0 0.0
    %461 = vmatpush1.xpose.msra.mxu0 0.0
    %462 = vmatprep.subr.mxu0 0.0
    %463 = vmatpush1.xpose.msra.mxu0 0.0
    %464 = vmatprep.subr.mxu0 0.0
    %465 = vmatpush1.xpose.msra.mxu0 0.0
    %466 = vmatprep.subr.mxu0 0.0
    %467 = vmatpush1.xpose.msra.mxu0 0.0
    %468 = vmatprep.subr.mxu0 0.0
    %469 = vmatpush1.xpose.msra.mxu0 0.0
    %470 = vmatprep.subr.mxu0 0.0
    %471 = vmatpush1.xpose.msra.mxu0 0.0
    %472 = vmatprep.subr.mxu0 0.0
    %473 = vmatpush1.xpose.msra.mxu0 0.0
    %474 = vmatprep.subr.mxu0 0.0
    %475 = vmatpush1.xpose.msra.mxu0 0.0
    %476 = vmatprep.subr.mxu0 0.0
    %477 = vmatpush1.xpose.msra.mxu0 0.0
    %478 = vmatprep.subr.mxu0 0.0
    %479 = vmatpush1.xpose.msra.mxu0 0.0
    %480 = vmatprep.subr.mxu0 0.0
    %481 = vmatpush1.xpose.msra.mxu0 0.0
    %482 = vmatprep.subr.mxu0 0.0
    %483 = vmatpush1.xpose.msra.mxu0 0.0
    %484 = vmatprep.subr.mxu0 0.0
    %485 = vmatpush1.xpose.msra.mxu0 0.0
    %486 = vmatprep.subr.mxu0 0.0
    %487 = vmatpush1.xpose.msra.mxu0 0.0
    %488 = vmatprep.subr.mxu0 0.0
    %489 = vmatpush1.xpose.msra.mxu0 0.0
    %490 = vmatprep.subr.mxu0 0.0
    %491 = vmatpush1.xpose.msra.mxu0 0.0
    %492 = vmatprep.subr.mxu0 0.0
    %493 = vmatpush1.xpose.msra.mxu0 0.0
    %494 = vmatprep.subr.mxu0 0.0
    %495 = vmatpush1.xpose.msra.mxu0 0.0
    %496 = vmatprep.subr.mxu0 0.0
    %497 = vmatpush1.xpose.msra.mxu0 0.0
    %498 = vmatprep.subr.mxu0 0.0
    %499 = vmatpush1.xpose.msra.mxu0 0.0
    %500 = vmatprep.subr.mxu0 0.0
    %501 = vmatpush1.xpose.msra.mxu0 0.0
    %502 = vmatprep.mubr.f32.mxu0 %v71
    %503 = vmatmul.mubr.f32.gmra.mrb[0].mxu0 %v70
    %v504 = vpop.f32.mrb[0].mxu0
    %v505 = vadd.f32 %v297, %v504
    %v506 = vpop.f32.mrb[0].mxu0
    %507 = vmatprep.mubr.f32.mxu0 %v78
    %508 = vmatmul.mubr.f32.gmra.mrb[0].mxu0 %v77
    %v509 = vpop.f32.mrb[0].mxu0
    %v510 = vadd.f32 %v297, %v509
    %v511 = vpop.f32.mrb[0].mxu0
    %512 = vmatprep.mubr.f32.mxu0 %v85
    %513 = vmatmul.mubr.f32.gmra.mrb[0].mxu0 %v84
    %v514 = vpop.f32.mrb[0].mxu0
    %v515 = vadd.f32 %v297, %v514
    %v516 = vpop.f32.mrb[0].mxu0
    %517 = vmatprep.mubr.f32.mxu0 %v92
    %518 = vmatmul.mubr.f32.gmra.mrb[0].mxu0 %v91
    %v519 = vpop.f32.mrb[0].mxu0
    %v520 = vadd.f32 %v297, %v519
    %v521 = vpop.f32.mrb[0].mxu0
    %522 = vmatprep.mubr.f32.mxu0 %v99
    %523 = vmatmul.mubr.f32.gmra.mrb[0].mxu0 %v98
    %v524 = vpop.f32.mrb[0].mxu0
    %v525 = vadd.f32 %v297, %v524
    %v526 = vpop.f32.mrb[0].mxu0
    %527 = vmatprep.mubr.f32.mxu0 %v106
    %528 = vmatmul.mubr.f32.gmra.mrb[0].mxu0 %v105
    %v529 = vpop.f32.mrb[0].mxu0
    %v530 = vadd.f32 %v297, %v529
    %v531 = vpop.f32.mrb[0].mxu0
    %532 = vmatprep.mubr.f32.mxu0 %v113
    %533 = vmatmul.mubr.f32.gmra.mrb[0].mxu0 %v112
    %v534 = vpop.f32.mrb[0].mxu0
    %v535 = vadd.f32 %v297, %v534
    %v536 = vpop.f32.mrb[0].mxu0
    %537 = vmatprep.mubr.f32.mxu0 %v120
    %538 = vmatmul.mubr.f32.gmra.mrb[0].mxu0 %v119
    %v539 = vpop.f32.mrb[0].mxu0
    %v540 = vadd.f32 %v297, %v539
    %v541 = vpop.f32.mrb[0].mxu0
    %542 = vmatprep.mubr.f32.mxu0 %v127
    %543 = vmatmul.mubr.f32.gmra.mrb[0].mxu0 %v126
    %v544 = vpop.f32.mrb[0].mxu0
    %v545 = vadd.f32 %v297, %v544
    %v546 = vpop.f32.mrb[0].mxu0
    %547 = vmatprep.mubr.f32.mxu0 %v134
    %548 = vmatmul.mubr.f32.gmra.mrb[0].mxu0 %v133
    %v549 = vpop.f32.mrb[0].mxu0
    %v550 = vadd.f32 %v297, %v549
    %v551 = vpop.f32.mrb[0].mxu0
    %552 = vmatprep.mubr.f32.mxu0 %v141
    %553 = vmatmul.mubr.f32.gmra.mrb[0].mxu0 %v140
    %v554 = vpop.f32.mrb[0].mxu0
    %v555 = vadd.f32 %v297, %v554
    %v556 = vpop.f32.mrb[0].mxu0
    %557 = vmatprep.mubr.f32.mxu0 %v148
    %558 = vmatmul.mubr.f32.gmra.mrb[0].mxu0 %v147
    %v559 = vpop.f32.mrb[0].mxu0
    %v560 = vadd.f32 %v297, %v559
    %v561 = vpop.f32.mrb[0].mxu0
    %562 = vmatprep.mubr.f32.mxu0 %v155
    %563 = vmatmul.mubr.f32.gmra.mrb[0].mxu0 %v154
    %v564 = vpop.f32.mrb[0].mxu0
    %v565 = vadd.f32 %v297, %v564
    %v566 = vpop.f32.mrb[0].mxu0
    %567 = vmatprep.mubr.f32.mxu0 %v162
    %568 = vmatmul.mubr.f32.gmra.mrb[0].mxu0 %v161
    %v569 = vpop.f32.mrb[0].mxu0
    %v570 = vadd.f32 %v297, %v569
    %v571 = vpop.f32.mrb[0].mxu0
    %572 = vmatprep.mubr.f32.mxu0 %v169
    %573 = vmatmul.mubr.f32.gmra.mrb[0].mxu0 %v168
    %v574 = vpop.f32.mrb[0].mxu0
    %v575 = vadd.f32 %v297, %v574
    %v576 = vpop.f32.mrb[0].mxu0
    %577 = vmatprep.mubr.f32.mxu0 %v176
    %578 = vmatmul.mubr.f32.gmra.mrb[0].mxu0 %v175
    %v579 = vpop.f32.mrb[0].mxu0
    %v580 = vadd.f32 %v297, %v579
    %v581 = vpop.f32.mrb[0].mxu0
    %582 = vmatprep.mubr.f32.mxu0 %v183
    %583 = vmatmul.mubr.f32.gmra.mrb[0].mxu0 %v182
    %v584 = vpop.f32.mrb[0].mxu0
    %v585 = vadd.f32 %v297, %v584
    %v586 = vpop.f32.mrb[0].mxu0
    %587 = vmatprep.mubr.f32.mxu0 %v190
    %588 = vmatmul.mubr.f32.gmra.mrb[0].mxu0 %v189
    %v589 = vpop.f32.mrb[0].mxu0
    %v590 = vadd.f32 %v297, %v589
    %v591 = vpop.f32.mrb[0].mxu0
    %592 = vmatprep.mubr.f32.mxu0 %v197
    %593 = vmatmul.mubr.f32.gmra.mrb[0].mxu0 %v196
    %v594 = vpop.f32.mrb[0].mxu0
    %v595 = vadd.f32 %v297, %v594
    %v596 = vpop.f32.mrb[0].mxu0
    %597 = vmatprep.mubr.f32.mxu0 %v204
    %598 = vmatmul.mubr.f32.gmra.mrb[0].mxu0 %v203
    %v599 = vpop.f32.mrb[0].mxu0
    %v600 = vadd.f32 %v297, %v599
    %v601 = vpop.f32.mrb[0].mxu0
    %602 = vmatprep.mubr.f32.mxu0 %v211
    %603 = vmatmul.mubr.f32.gmra.mrb[0].mxu0 %v210
    %v604 = vpop.f32.mrb[0].mxu0
    %v605 = vadd.f32 %v297, %v604
    %v606 = vpop.f32.mrb[0].mxu0
    %607 = vmatprep.mubr.f32.mxu0 %v218
    %608 = vmatmul.mubr.f32.gmra.mrb[0].mxu0 %v217
    %v609 = vpop.f32.mrb[0].mxu0
    %v610 = vadd.f32 %v297, %v609
    %v611 = vpop.f32.mrb[0].mxu0
    %612 = vmatprep.mubr.f32.mxu0 %v225
    %613 = vmatmul.mubr.f32.gmra.mrb[0].mxu0 %v224
    %v614 = vpop.f32.mrb[0].mxu0
    %v615 = vadd.f32 %v297, %v614
    %v616 = vpop.f32.mrb[0].mxu0
    %617 = vmatprep.mubr.f32.mxu0 %v232
    %618 = vmatmul.mubr.f32.gmra.mrb[0].mxu0 %v231
    %v619 = vpop.f32.mrb[0].mxu0
    %v620 = vadd.f32 %v297, %v619
    %v621 = vpop.f32.mrb[0].mxu0
    %622 = vmatprep.mubr.f32.mxu0 %v239
    %623 = vmatmul.mubr.f32.gmra.mrb[0].mxu0 %v238
    %v624 = vpop.f32.mrb[0].mxu0
    %v625 = vadd.f32 %v297, %v624
    %v626 = vpop.f32.mrb[0].mxu0
    %627 = vmatprep.mubr.f32.mxu0 %v246
    %628 = vmatmul.mubr.f32.gmra.mrb[0].mxu0 %v245
    %v629 = vpop.f32.mrb[0].mxu0
    %v630 = vadd.f32 %v297, %v629
    %v631 = vpop.f32.mrb[0].mxu0
    %632 = vmatprep.mubr.f32.mxu0 %v253
    %633 = vmatmul.mubr.f32.gmra.mrb[0].mxu0 %v252
    %v634 = vpop.f32.mrb[0].mxu0
    %v635 = vadd.f32 %v297, %v634
    %v636 = vpop.f32.mrb[0].mxu0
    %637 = vmatprep.mubr.f32.mxu0 %v260
    %638 = vmatmul.mubr.f32.gmra.mrb[0].mxu0 %v259
    %v639 = vpop.f32.mrb[0].mxu0
    %v640 = vadd.f32 %v297, %v639
    %v641 = vpop.f32.mrb[0].mxu0
    %642 = vmatprep.mubr.f32.mxu0 %v267
    %643 = vmatmul.mubr.f32.gmra.mrb[0].mxu0 %v266
    %v644 = vpop.f32.mrb[0].mxu0
    %v645 = vadd.f32 %v297, %v644
    %v646 = vpop.f32.mrb[0].mxu0
    %647 = vmatprep.mubr.f32.mxu0 %v274
    %648 = vmatmul.mubr.f32.gmra.mrb[0].mxu0 %v273
    %v649 = vpop.f32.mrb[0].mxu0
    %v650 = vadd.f32 %v297, %v649
    %v651 = vpop.f32.mrb[0].mxu0
    %652 = vmatprep.mubr.f32.mxu0 %v281
    %653 = vmatmul.mubr.f32.gmra.mrb[0].mxu0 %v280
    %v654 = vpop.f32.mrb[0].mxu0
    %v655 = vadd.f32 %v297, %v654
    %v656 = vpop.f32.mrb[0].mxu0
    %657 = vmatprep.mubr.f32.mxu0 %v288
    %658 = vmatmul.mubr.f32.gmra.mrb[0].mxu0 %v287
    %v659 = vpop.f32.mrb[0].mxu0
    %v660 = vadd.f32 %v297, %v659
    %v661 = vpop.f32.mrb[0].mxu0
    %662 = vdwg.mxu0
    %663 = vmatprep.subr.mxu0 %v316
    %664 = vmatpush1.xpose.msra.mxu0 %v314
    %665 = vmatprep.subr.mxu0 0.0
    %666 = vmatpush1.xpose.msra.mxu0 0.0
    %667 = vmatprep.subr.mxu0 0.0
    %668 = vmatpush1.xpose.msra.mxu0 0.0
    %669 = vmatprep.subr.mxu0 0.0
    %670 = vmatpush1.xpose.msra.mxu0 0.0
    %671 = vmatprep.subr.mxu0 0.0
    %672 = vmatpush1.xpose.msra.mxu0 0.0
    %673 = vmatprep.subr.mxu0 0.0
    %674 = vmatpush1.xpose.msra.mxu0 0.0
    %675 = vmatprep.subr.mxu0 0.0
    %676 = vmatpush1.xpose.msra.mxu0 0.0
    %677 = vmatprep.subr.mxu0 0.0
    %678 = vmatpush1.xpose.msra.mxu0 0.0
    %679 = vmatprep.subr.mxu0 0.0
    %680 = vmatpush1.xpose.msra.mxu0 0.0
    %681 = vmatprep.subr.mxu0 0.0
    %682 = vmatpush1.xpose.msra.mxu0 0.0
    %683 = vmatprep.subr.mxu0 0.0
    %684 = vmatpush1.xpose.msra.mxu0 0.0
    %685 = vmatprep.subr.mxu0 0.0
    %686 = vmatpush1.xpose.msra.mxu0 0.0
    %687 = vmatprep.subr.mxu0 0.0
    %688 = vmatpush1.xpose.msra.mxu0 0.0
    %689 = vmatprep.subr.mxu0 0.0
    %690 = vmatpush1.xpose.msra.mxu0 0.0
    %691 = vmatprep.subr.mxu0 0.0
    %692 = vmatpush1.xpose.msra.mxu0 0.0
    %693 = vmatprep.subr.mxu0 0.0
    %694 = vmatpush1.xpose.msra.mxu0 0.0
    %695 = vmatprep.subr.mxu0 0.0
    %696 = vmatpush1.xpose.msra.mxu0 0.0
    %697 = vmatprep.subr.mxu0 0.0
    %698 = vmatpush1.xpose.msra.mxu0 0.0
    %699 = vmatprep.subr.mxu0 0.0
    %700 = vmatpush1.xpose.msra.mxu0 0.0
    %701 = vmatprep.subr.mxu0 0.0
    %702 = vmatpush1.xpose.msra.mxu0 0.0
    %703 = vmatprep.subr.mxu0 0.0
    %704 = vmatpush1.xpose.msra.mxu0 0.0
    %705 = vmatprep.subr.mxu0 0.0
    %706 = vmatpush1.xpose.msra.mxu0 0.0
    %707 = vmatprep.subr.mxu0 0.0
    %708 = vmatpush1.xpose.msra.mxu0 0.0
    %709 = vmatprep.subr.mxu0 0.0
    %710 = vmatpush1.xpose.msra.mxu0 0.0
    %711 = vmatprep.subr.mxu0 0.0
    %712 = vmatpush1.xpose.msra.mxu0 0.0
    %713 = vmatprep.subr.mxu0 0.0
    %714 = vmatpush1.xpose.msra.mxu0 0.0
    %715 = vmatprep.subr.mxu0 0.0
    %716 = vmatpush1.xpose.msra.mxu0 0.0
    %717 = vmatprep.subr.mxu0 0.0
    %718 = vmatpush1.xpose.msra.mxu0 0.0
    %719 = vmatprep.subr.mxu0 0.0
    %720 = vmatpush1.xpose.msra.mxu0 0.0
    %721 = vmatprep.subr.mxu0 0.0
    %722 = vmatpush1.xpose.msra.mxu0 0.0
    %723 = vmatprep.subr.mxu0 0.0
    %724 = vmatpush1.xpose.msra.mxu0 0.0
    %725 = vmatprep.subr.mxu0 0.0
    %726 = vmatpush1.xpose.msra.mxu0 0.0
    %727 = vmatprep.mubr.f32.mxu0 %v73
    %728 = vmatmul.mubr.f32.gmra.mrb[0].mxu0 %v72
    %v729 = vpop.f32.mrb[0].mxu0
    %v730 = vadd.f32 %v505, %v729
    %v731 = vpop.f32.mrb[0].mxu0
    %732 = vmatprep.mubr.f32.mxu0 %v80
    %733 = vmatmul.mubr.f32.gmra.mrb[0].mxu0 %v79
    %v734 = vpop.f32.mrb[0].mxu0
    %v735 = vadd.f32 %v510, %v734
    %v736 = vpop.f32.mrb[0].mxu0
    %737 = vmatprep.mubr.f32.mxu0 %v87
    %738 = vmatmul.mubr.f32.gmra.mrb[0].mxu0 %v86
    %v739 = vpop.f32.mrb[0].mxu0
    %v740 = vadd.f32 %v515, %v739
    %v741 = vpop.f32.mrb[0].mxu0
    %742 = vmatprep.mubr.f32.mxu0 %v94
    %743 = vmatmul.mubr.f32.gmra.mrb[0].mxu0 %v93
    %v744 = vpop.f32.mrb[0].mxu0
    %v745 = vadd.f32 %v520, %v744
    %v746 = vpop.f32.mrb[0].mxu0
    %747 = vmatprep.mubr.f32.mxu0 %v101
    %748 = vmatmul.mubr.f32.gmra.mrb[0].mxu0 %v100
    %v749 = vpop.f32.mrb[0].mxu0
    %v750 = vadd.f32 %v525, %v749
    %v751 = vpop.f32.mrb[0].mxu0
    %752 = vmatprep.mubr.f32.mxu0 %v108
    %753 = vmatmul.mubr.f32.gmra.mrb[0].mxu0 %v107
    %v754 = vpop.f32.mrb[0].mxu0
    %v755 = vadd.f32 %v530, %v754
    %v756 = vpop.f32.mrb[0].mxu0
    %757 = vmatprep.mubr.f32.mxu0 %v115
    %758 = vmatmul.mubr.f32.gmra.mrb[0].mxu0 %v114
    %v759 = vpop.f32.mrb[0].mxu0
    %v760 = vadd.f32 %v535, %v759
    %v761 = vpop.f32.mrb[0].mxu0
    %762 = vmatprep.mubr.f32.mxu0 %v122
    %763 = vmatmul.mubr.f32.gmra.mrb[0].mxu0 %v121
    %v764 = vpop.f32.mrb[0].mxu0
    %v765 = vadd.f32 %v540, %v764
    %v766 = vpop.f32.mrb[0].mxu0
    %767 = vmatprep.mubr.f32.mxu0 %v129
    %768 = vmatmul.mubr.f32.gmra.mrb[0].mxu0 %v128
    %v769 = vpop.f32.mrb[0].mxu0
    %v770 = vadd.f32 %v545, %v769
    %v771 = vpop.f32.mrb[0].mxu0
    %772 = vmatprep.mubr.f32.mxu0 %v136
    %773 = vmatmul.mubr.f32.gmra.mrb[0].mxu0 %v135
    %v774 = vpop.f32.mrb[0].mxu0
    %v775 = vadd.f32 %v550, %v774
    %v776 = vpop.f32.mrb[0].mxu0
    %777 = vmatprep.mubr.f32.mxu0 %v143
    %778 = vmatmul.mubr.f32.gmra.mrb[0].mxu0 %v142
    %v779 = vpop.f32.mrb[0].mxu0
    %v780 = vadd.f32 %v555, %v779
    %v781 = vpop.f32.mrb[0].mxu0
    %782 = vmatprep.mubr.f32.mxu0 %v150
    %783 = vmatmul.mubr.f32.gmra.mrb[0].mxu0 %v149
    %v784 = vpop.f32.mrb[0].mxu0
    %v785 = vadd.f32 %v560, %v784
    %v786 = vpop.f32.mrb[0].mxu0
    %787 = vmatprep.mubr.f32.mxu0 %v157
    %788 = vmatmul.mubr.f32.gmra.mrb[0].mxu0 %v156
    %v789 = vpop.f32.mrb[0].mxu0
    %v790 = vadd.f32 %v565, %v789
    %v791 = vpop.f32.mrb[0].mxu0
    %792 = vmatprep.mubr.f32.mxu0 %v164
    %793 = vmatmul.mubr.f32.gmra.mrb[0].mxu0 %v163
    %v794 = vpop.f32.mrb[0].mxu0
    %v795 = vadd.f32 %v570, %v794
    %v796 = vpop.f32.mrb[0].mxu0
    %797 = vmatprep.mubr.f32.mxu0 %v171
    %798 = vmatmul.mubr.f32.gmra.mrb[0].mxu0 %v170
    %v799 = vpop.f32.mrb[0].mxu0
    %v800 = vadd.f32 %v575, %v799
    %v801 = vpop.f32.mrb[0].mxu0
    %802 = vmatprep.mubr.f32.mxu0 %v178
    %803 = vmatmul.mubr.f32.gmra.mrb[0].mxu0 %v177
    %v804 = vpop.f32.mrb[0].mxu0
    %v805 = vadd.f32 %v580, %v804
    %v806 = vpop.f32.mrb[0].mxu0
    %807 = vmatprep.mubr.f32.mxu0 %v185
    %808 = vmatmul.mubr.f32.gmra.mrb[0].mxu0 %v184
    %v809 = vpop.f32.mrb[0].mxu0
    %v810 = vadd.f32 %v585, %v809
    %v811 = vpop.f32.mrb[0].mxu0
    %812 = vmatprep.mubr.f32.mxu0 %v192
    %813 = vmatmul.mubr.f32.gmra.mrb[0].mxu0 %v191
    %v814 = vpop.f32.mrb[0].mxu0
    %v815 = vadd.f32 %v590, %v814
    %v816 = vpop.f32.mrb[0].mxu0
    %817 = vmatprep.mubr.f32.mxu0 %v199
    %818 = vmatmul.mubr.f32.gmra.mrb[0].mxu0 %v198
    %v819 = vpop.f32.mrb[0].mxu0
    %v820 = vadd.f32 %v595, %v819
    %v821 = vpop.f32.mrb[0].mxu0
    %822 = vmatprep.mubr.f32.mxu0 %v206
    %823 = vmatmul.mubr.f32.gmra.mrb[0].mxu0 %v205
    %v824 = vpop.f32.mrb[0].mxu0
    %v825 = vadd.f32 %v600, %v824
    %v826 = vpop.f32.mrb[0].mxu0
    %827 = vmatprep.mubr.f32.mxu0 %v213
    %828 = vmatmul.mubr.f32.gmra.mrb[0].mxu0 %v212
    %v829 = vpop.f32.mrb[0].mxu0
    %v830 = vadd.f32 %v605, %v829
    %v831 = vpop.f32.mrb[0].mxu0
    %832 = vmatprep.mubr.f32.mxu0 %v220
    %833 = vmatmul.mubr.f32.gmra.mrb[0].mxu0 %v219
    %v834 = vpop.f32.mrb[0].mxu0
    %v835 = vadd.f32 %v610, %v834
    %v836 = vpop.f32.mrb[0].mxu0
    %837 = vmatprep.mubr.f32.mxu0 %v227
    %838 = vmatmul.mubr.f32.gmra.mrb[0].mxu0 %v226
    %v839 = vpop.f32.mrb[0].mxu0
    %v840 = vadd.f32 %v615, %v839
    %v841 = vpop.f32.mrb[0].mxu0
    %842 = vmatprep.mubr.f32.mxu0 %v234
    %843 = vmatmul.mubr.f32.gmra.mrb[0].mxu0 %v233
    %v844 = vpop.f32.mrb[0].mxu0
    %v845 = vadd.f32 %v620, %v844
    %v846 = vpop.f32.mrb[0].mxu0
    %847 = vmatprep.mubr.f32.mxu0 %v241
    %848 = vmatmul.mubr.f32.gmra.mrb[0].mxu0 %v240
    %v849 = vpop.f32.mrb[0].mxu0
    %v850 = vadd.f32 %v625, %v849
    %v851 = vpop.f32.mrb[0].mxu0
    %852 = vmatprep.mubr.f32.mxu0 %v248
    %853 = vmatmul.mubr.f32.gmra.mrb[0].mxu0 %v247
    %v854 = vpop.f32.mrb[0].mxu0
    %v855 = vadd.f32 %v630, %v854
    %v856 = vpop.f32.mrb[0].mxu0
    %857 = vmatprep.mubr.f32.mxu0 %v255
    %858 = vmatmul.mubr.f32.gmra.mrb[0].mxu0 %v254
    %v859 = vpop.f32.mrb[0].mxu0
    %v860 = vadd.f32 %v635, %v859
    %v861 = vpop.f32.mrb[0].mxu0
    %862 = vmatprep.mubr.f32.mxu0 %v262
    %863 = vmatmul.mubr.f32.gmra.mrb[0].mxu0 %v261
    %v864 = vpop.f32.mrb[0].mxu0
    %v865 = vadd.f32 %v640, %v864
    %v866 = vpop.f32.mrb[0].mxu0
    %867 = vmatprep.mubr.f32.mxu0 %v269
    %868 = vmatmul.mubr.f32.gmra.mrb[0].mxu0 %v268
    %v869 = vpop.f32.mrb[0].mxu0
    %v870 = vadd.f32 %v645, %v869
    %v871 = vpop.f32.mrb[0].mxu0
    %872 = vmatprep.mubr.f32.mxu0 %v276
    %873 = vmatmul.mubr.f32.gmra.mrb[0].mxu0 %v275
    %v874 = vpop.f32.mrb[0].mxu0
    %v875 = vadd.f32 %v650, %v874
    %v876 = vpop.f32.mrb[0].mxu0
    %877 = vmatprep.mubr.f32.mxu0 %v283
    %878 = vmatmul.mubr.f32.gmra.mrb[0].mxu0 %v282
    %v879 = vpop.f32.mrb[0].mxu0
    %v880 = vadd.f32 %v655, %v879
    %v881 = vpop.f32.mrb[0].mxu0
    %882 = vmatprep.mubr.f32.mxu0 %v290
    %883 = vmatmul.mubr.f32.gmra.mrb[0].mxu0 %v289
    %v884 = vpop.f32.mrb[0].mxu0
    %v885 = vadd.f32 %v660, %v884
    %v886 = vpop.f32.mrb[0].mxu0
    %887 = vdwg.mxu0
    %888 = vmatprep.subr.mxu0 %v332
    %889 = vmatpush1.xpose.msra.mxu0 %v324
    %890 = vmatprep.subr.mxu0 0.0
    %891 = vmatpush1.xpose.msra.mxu0 0.0
    %892 = vmatprep.subr.mxu0 0.0
    %893 = vmatpush1.xpose.msra.mxu0 0.0
    %894 = vmatprep.subr.mxu0 0.0
    %895 = vmatpush1.xpose.msra.mxu0 0.0
    %896 = vmatprep.subr.mxu0 0.0
    %897 = vmatpush1.xpose.msra.mxu0 0.0
    %898 = vmatprep.subr.mxu0 0.0
    %899 = vmatpush1.xpose.msra.mxu0 0.0
    %900 = vmatprep.subr.mxu0 0.0
    %901 = vmatpush1.xpose.msra.mxu0 0.0
    %902 = vmatprep.subr.mxu0 0.0
    %903 = vmatpush1.xpose.msra.mxu0 0.0
    %904 = vmatprep.subr.mxu0 0.0
    %905 = vmatpush1.xpose.msra.mxu0 0.0
    %906 = vmatprep.subr.mxu0 0.0
    %907 = vmatpush1.xpose.msra.mxu0 0.0
    %908 = vmatprep.subr.mxu0 0.0
    %909 = vmatpush1.xpose.msra.mxu0 0.0
    %910 = vmatprep.subr.mxu0 0.0
    %911 = vmatpush1.xpose.msra.mxu0 0.0
    %912 = vmatprep.subr.mxu0 0.0
    %913 = vmatpush1.xpose.msra.mxu0 0.0
    %914 = vmatprep.subr.mxu0 0.0
    %915 = vmatpush1.xpose.msra.mxu0 0.0
    %916 = vmatprep.subr.mxu0 0.0
    %917 = vmatpush1.xpose.msra.mxu0 0.0
    %918 = vmatprep.subr.mxu0 0.0
    %919 = vmatpush1.xpose.msra.mxu0 0.0
    %920 = vmatprep.subr.mxu0 0.0
    %921 = vmatpush1.xpose.msra.mxu0 0.0
    %922 = vmatprep.subr.mxu0 0.0
    %923 = vmatpush1.xpose.msra.mxu0 0.0
    %924 = vmatprep.subr.mxu0 0.0
    %925 = vmatpush1.xpose.msra.mxu0 0.0
    %926 = vmatprep.subr.mxu0 0.0
    %927 = vmatpush1.xpose.msra.mxu0 0.0
    %928 = vmatprep.subr.mxu0 0.0
    %929 = vmatpush1.xpose.msra.mxu0 0.0
    %930 = vmatprep.subr.mxu0 0.0
    %931 = vmatpush1.xpose.msra.mxu0 0.0
    %932 = vmatprep.subr.mxu0 0.0
    %933 = vmatpush1.xpose.msra.mxu0 0.0
    %934 = vmatprep.subr.mxu0 0.0
    %935 = vmatpush1.xpose.msra.mxu0 0.0
    %936 = vmatprep.subr.mxu0 0.0
    %937 = vmatpush1.xpose.msra.mxu0 0.0
    %938 = vmatprep.subr.mxu0 0.0
    %939 = vmatpush1.xpose.msra.mxu0 0.0
    %940 = vmatprep.subr.mxu0 0.0
    %941 = vmatpush1.xpose.msra.mxu0 0.0
    %942 = vmatprep.subr.mxu0 0.0
    %943 = vmatpush1.xpose.msra.mxu0 0.0
    %944 = vmatprep.subr.mxu0 0.0
    %945 = vmatpush1.xpose.msra.mxu0 0.0
    %946 = vmatprep.subr.mxu0 0.0
    %947 = vmatpush1.xpose.msra.mxu0 0.0
    %948 = vmatprep.subr.mxu0 0.0
    %949 = vmatpush1.xpose.msra.mxu0 0.0
    %950 = vmatprep.subr.mxu0 0.0
    %951 = vmatpush1.xpose.msra.mxu0 0.0
    %952 = vmatprep.mubr.f32.mxu0 %v75
    %953 = vmatmul.mubr.f32.gmra.mrb[0].mxu0 %v74
    %v954 = vpop.f32.mrb[0].mxu0
    %v955 = vadd.f32 %v730, %v954
    %v956 = vpop.f32.mrb[0].mxu0
    %957 = vmatprep.mubr.f32.mxu0 %v82
    %958 = vmatmul.mubr.f32.gmra.mrb[0].mxu0 %v81
    %v959 = vpop.f32.mrb[0].mxu0
    %v960 = vadd.f32 %v735, %v959
    %v961 = vpop.f32.mrb[0].mxu0
    %962 = vmatprep.mubr.f32.mxu0 %v89
    %963 = vmatmul.mubr.f32.gmra.mrb[0].mxu0 %v88
    %v964 = vpop.f32.mrb[0].mxu0
    %v965 = vadd.f32 %v740, %v964
    %v966 = vpop.f32.mrb[0].mxu0
    %967 = vmatprep.mubr.f32.mxu0 %v96
    %968 = vmatmul.mubr.f32.gmra.mrb[0].mxu0 %v95
    %v969 = vpop.f32.mrb[0].mxu0
    %v970 = vadd.f32 %v745, %v969
    %v971 = vpop.f32.mrb[0].mxu0
    %972 = vmatprep.mubr.f32.mxu0 %v103
    %973 = vmatmul.mubr.f32.gmra.mrb[0].mxu0 %v102
    %v974 = vpop.f32.mrb[0].mxu0
    %v975 = vadd.f32 %v750, %v974
    %v976 = vpop.f32.mrb[0].mxu0
    %977 = vmatprep.mubr.f32.mxu0 %v110
    %978 = vmatmul.mubr.f32.gmra.mrb[0].mxu0 %v109
    %v979 = vpop.f32.mrb[0].mxu0
    %v980 = vadd.f32 %v755, %v979
    %v981 = vpop.f32.mrb[0].mxu0
    %982 = vmatprep.mubr.f32.mxu0 %v117
    %983 = vmatmul.mubr.f32.gmra.mrb[0].mxu0 %v116
    %v984 = vpop.f32.mrb[0].mxu0
    %v985 = vadd.f32 %v760, %v984
    %v986 = vpop.f32.mrb[0].mxu0
    %987 = vmatprep.mubr.f32.mxu0 %v124
    %988 = vmatmul.mubr.f32.gmra.mrb[0].mxu0 %v123
    %v989 = vpop.f32.mrb[0].mxu0
    %v990 = vadd.f32 %v765, %v989
    %v991 = vpop.f32.mrb[0].mxu0
    %992 = vmatprep.mubr.f32.mxu0 %v131
    %993 = vmatmul.mubr.f32.gmra.mrb[0].mxu0 %v130
    %v994 = vpop.f32.mrb[0].mxu0
    %v995 = vadd.f32 %v770, %v994
    %v996 = vpop.f32.mrb[0].mxu0
    %997 = vmatprep.mubr.f32.mxu0 %v138
    %998 = vmatmul.mubr.f32.gmra.mrb[0].mxu0 %v137
    %v999 = vpop.f32.mrb[0].mxu0
    %v1000 = vadd.f32 %v775, %v999
    %v1001 = vpop.f32.mrb[0].mxu0
    %1002 = vmatprep.mubr.f32.mxu0 %v145
    %1003 = vmatmul.mubr.f32.gmra.mrb[0].mxu0 %v144
    %v1004 = vpop.f32.mrb[0].mxu0
    %v1005 = vadd.f32 %v780, %v1004
    %v1006 = vpop.f32.mrb[0].mxu0
    %1007 = vmatprep.mubr.f32.mxu0 %v152
    %1008 = vmatmul.mubr.f32.gmra.mrb[0].mxu0 %v151
    %v1009 = vpop.f32.mrb[0].mxu0
    %v1010 = vadd.f32 %v785, %v1009
    %v1011 = vpop.f32.mrb[0].mxu0
    %1012 = vmatprep.mubr.f32.mxu0 %v159
    %1013 = vmatmul.mubr.f32.gmra.mrb[0].mxu0 %v158
    %v1014 = vpop.f32.mrb[0].mxu0
    %v1015 = vadd.f32 %v790, %v1014
    %v1016 = vpop.f32.mrb[0].mxu0
    %1017 = vmatprep.mubr.f32.mxu0 %v166
    %1018 = vmatmul.mubr.f32.gmra.mrb[0].mxu0 %v165
    %v1019 = vpop.f32.mrb[0].mxu0
    %v1020 = vadd.f32 %v795, %v1019
    %v1021 = vpop.f32.mrb[0].mxu0
    %1022 = vmatprep.mubr.f32.mxu0 %v173
    %1023 = vmatmul.mubr.f32.gmra.mrb[0].mxu0 %v172
    %v1024 = vpop.f32.mrb[0].mxu0
    %v1025 = vadd.f32 %v800, %v1024
    %v1026 = vpop.f32.mrb[0].mxu0
    %1027 = vmatprep.mubr.f32.mxu0 %v180
    %1028 = vmatmul.mubr.f32.gmra.mrb[0].mxu0 %v179
    %v1029 = vpop.f32.mrb[0].mxu0
    %v1030 = vadd.f32 %v805, %v1029
    %v1031 = vpop.f32.mrb[0].mxu0
    %1032 = vmatprep.mubr.f32.mxu0 %v187
    %1033 = vmatmul.mubr.f32.gmra.mrb[0].mxu0 %v186
    %v1034 = vpop.f32.mrb[0].mxu0
    %v1035 = vadd.f32 %v810, %v1034
    %v1036 = vpop.f32.mrb[0].mxu0
    %1037 = vmatprep.mubr.f32.mxu0 %v194
    %1038 = vmatmul.mubr.f32.gmra.mrb[0].mxu0 %v193
    %v1039 = vpop.f32.mrb[0].mxu0
    %v1040 = vadd.f32 %v815, %v1039
    %v1041 = vpop.f32.mrb[0].mxu0
    %1042 = vmatprep.mubr.f32.mxu0 %v201
    %1043 = vmatmul.mubr.f32.gmra.mrb[0].mxu0 %v200
    %v1044 = vpop.f32.mrb[0].mxu0
    %v1045 = vadd.f32 %v820, %v1044
    %v1046 = vpop.f32.mrb[0].mxu0
    %1047 = vmatprep.mubr.f32.mxu0 %v208
    %1048 = vmatmul.mubr.f32.gmra.mrb[0].mxu0 %v207
    %v1049 = vpop.f32.mrb[0].mxu0
    %v1050 = vadd.f32 %v825, %v1049
    %v1051 = vpop.f32.mrb[0].mxu0
    %1052 = vmatprep.mubr.f32.mxu0 %v215
    %1053 = vmatmul.mubr.f32.gmra.mrb[0].mxu0 %v214
    %v1054 = vpop.f32.mrb[0].mxu0
    %v1055 = vadd.f32 %v830, %v1054
    %v1056 = vpop.f32.mrb[0].mxu0
    %1057 = vmatprep.mubr.f32.mxu0 %v222
    %1058 = vmatmul.mubr.f32.gmra.mrb[0].mxu0 %v221
    %v1059 = vpop.f32.mrb[0].mxu0
    %v1060 = vadd.f32 %v835, %v1059
    %v1061 = vpop.f32.mrb[0].mxu0
    %1062 = vmatprep.mubr.f32.mxu0 %v229
    %1063 = vmatmul.mubr.f32.gmra.mrb[0].mxu0 %v228
    %v1064 = vpop.f32.mrb[0].mxu0
    %v1065 = vadd.f32 %v840, %v1064
    %v1066 = vpop.f32.mrb[0].mxu0
    %1067 = vmatprep.mubr.f32.mxu0 %v236
    %1068 = vmatmul.mubr.f32.gmra.mrb[0].mxu0 %v235
    %v1069 = vpop.f32.mrb[0].mxu0
    %v1070 = vadd.f32 %v845, %v1069
    %v1071 = vpop.f32.mrb[0].mxu0
    %1072 = vmatprep.mubr.f32.mxu0 %v243
    %1073 = vmatmul.mubr.f32.gmra.mrb[0].mxu0 %v242
    %v1074 = vpop.f32.mrb[0].mxu0
    %v1075 = vadd.f32 %v850, %v1074
    %v1076 = vpop.f32.mrb[0].mxu0
    %1077 = vmatprep.mubr.f32.mxu0 %v250
    %1078 = vmatmul.mubr.f32.gmra.mrb[0].mxu0 %v249
    %v1079 = vpop.f32.mrb[0].mxu0
    %v1080 = vadd.f32 %v855, %v1079
    %v1081 = vpop.f32.mrb[0].mxu0
    %1082 = vmatprep.mubr.f32.mxu0 %v257
    %1083 = vmatmul.mubr.f32.gmra.mrb[0].mxu0 %v256
    %v1084 = vpop.f32.mrb[0].mxu0
    %v1085 = vadd.f32 %v860, %v1084
    %v1086 = vpop.f32.mrb[0].mxu0
    %1087 = vmatprep.mubr.f32.mxu0 %v264
    %1088 = vmatmul.mubr.f32.gmra.mrb[0].mxu0 %v263
    %v1089 = vpop.f32.mrb[0].mxu0
    %v1090 = vadd.f32 %v865, %v1089
    %v1091 = vpop.f32.mrb[0].mxu0
    %1092 = vmatprep.mubr.f32.mxu0 %v271
    %1093 = vmatmul.mubr.f32.gmra.mrb[0].mxu0 %v270
    %v1094 = vpop.f32.mrb[0].mxu0
    %v1095 = vadd.f32 %v870, %v1094
    %v1096 = vpop.f32.mrb[0].mxu0
    %1097 = vmatprep.mubr.f32.mxu0 %v278
    %1098 = vmatmul.mubr.f32.gmra.mrb[0].mxu0 %v277
    %v1099 = vpop.f32.mrb[0].mxu0
    %v1100 = vadd.f32 %v875, %v1099
    %v1101 = vpop.f32.mrb[0].mxu0
    %1102 = vmatprep.mubr.f32.mxu0 %v285
    %1103 = vmatmul.mubr.f32.gmra.mrb[0].mxu0 %v284
    %v1104 = vpop.f32.mrb[0].mxu0
    %v1105 = vadd.f32 %v880, %v1104
    %v1106 = vpop.f32.mrb[0].mxu0
    %1107 = vmatprep.mubr.f32.mxu0 %v292
    %1108 = vmatmul.mubr.f32.gmra.mrb[0].mxu0 %v291
    %v1109 = vpop.f32.mrb[0].mxu0
    %v1110 = vadd.f32 %v885, %v1109
    %v1111 = vpop.f32.mrb[0].mxu0
    %1112 = vdwg.mxu0
    %1113 = vmatprep.subr.mxu0 0.0
    %1114 = vmatpush1.xpose.msra.mxu0 %v436
    %1115 = vmatprep.subr.mxu0 0.0
    %1116 = vmatpush1.xpose.msra.mxu0 0.0
    %1117 = vmatprep.subr.mxu0 0.0
    %1118 = vmatpush1.xpose.msra.mxu0 0.0
    %1119 = vmatprep.subr.mxu0 0.0
    %1120 = vmatpush1.xpose.msra.mxu0 0.0
    %1121 = vmatprep.subr.mxu0 0.0
    %1122 = vmatpush1.xpose.msra.mxu0 0.0
    %1123 = vmatprep.subr.mxu0 0.0
    %1124 = vmatpush1.xpose.msra.mxu0 0.0
    %1125 = vmatprep.subr.mxu0 0.0
    %1126 = vmatpush1.xpose.msra.mxu0 0.0
    %1127 = vmatprep.subr.mxu0 0.0
    %1128 = vmatpush1.xpose.msra.mxu0 0.0
    %1129 = vmatprep.subr.mxu0 0.0
    %1130 = vmatpush1.xpose.msra.mxu0 0.0
    %1131 = vmatprep.subr.mxu0 0.0
    %1132 = vmatpush1.xpose.msra.mxu0 0.0
    %1133 = vmatprep.subr.mxu0 0.0
    %1134 = vmatpush1.xpose.msra.mxu0 0.0
    %1135 = vmatprep.subr.mxu0 0.0
    %1136 = vmatpush1.xpose.msra.mxu0 0.0
    %1137 = vmatprep.subr.mxu0 0.0
    %1138 = vmatpush1.xpose.msra.mxu0 0.0
    %1139 = vmatprep.subr.mxu0 0.0
    %1140 = vmatpush1.xpose.msra.mxu0 0.0
    %1141 = vmatprep.subr.mxu0 0.0
    %1142 = vmatpush1.xpose.msra.mxu0 0.0
    %1143 = vmatprep.subr.mxu0 0.0
    %1144 = vmatpush1.xpose.msra.mxu0 0.0
    %1145 = vmatprep.subr.mxu0 0.0
    %1146 = vmatpush1.xpose.msra.mxu0 0.0
    %1147 = vmatprep.subr.mxu0 0.0
    %1148 = vmatpush1.xpose.msra.mxu0 0.0
    %1149 = vmatprep.subr.mxu0 0.0
    %1150 = vmatpush1.xpose.msra.mxu0 0.0
    %1151 = vmatprep.subr.mxu0 0.0
    %1152 = vmatpush1.xpose.msra.mxu0 0.0
    %1153 = vmatprep.subr.mxu0 0.0
    %1154 = vmatpush1.xpose.msra.mxu0 0.0
    %1155 = vmatprep.subr.mxu0 0.0
    %1156 = vmatpush1.xpose.msra.mxu0 0.0
    %1157 = vmatprep.subr.mxu0 0.0
    %1158 = vmatpush1.xpose.msra.mxu0 0.0
    %1159 = vmatprep.subr.mxu0 0.0
    %1160 = vmatpush1.xpose.msra.mxu0 0.0
    %1161 = vmatprep.subr.mxu0 0.0
    %1162 = vmatpush1.xpose.msra.mxu0 0.0
    %1163 = vmatprep.subr.mxu0 0.0
    %1164 = vmatpush1.xpose.msra.mxu0 0.0
    %1165 = vmatprep.subr.mxu0 0.0
    %1166 = vmatpush1.xpose.msra.mxu0 0.0
    %1167 = vmatprep.subr.mxu0 0.0
    %1168 = vmatpush1.xpose.msra.mxu0 0.0
    %1169 = vmatprep.subr.mxu0 0.0
    %1170 = vmatpush1.xpose.msra.mxu0 0.0
    %1171 = vmatprep.subr.mxu0 0.0
    %1172 = vmatpush1.xpose.msra.mxu0 0.0
    %1173 = vmatprep.subr.mxu0 0.0
    %1174 = vmatpush1.xpose.msra.mxu0 0.0
    %1175 = vmatprep.subr.mxu0 0.0
    %1176 = vmatpush1.xpose.msra.mxu0 0.0
    %1177 = vmatprep.mubr.f32.mxu0 0.0
    %1178 = vmatmul.mubr.f32.gmra.mrb[0].mxu0 %v341
    %v1179 = vpop.f32.mrb[0].mxu0
    %v1180 = vadd.f32 %v955, %v1179
    %v1181 = vpop.f32.mrb[0].mxu0
    %1182 = vmatprep.mubr.f32.mxu0 0.0
    %1183 = vmatmul.mubr.f32.gmra.mrb[0].mxu0 %v344
    %v1184 = vpop.f32.mrb[0].mxu0
    %v1185 = vadd.f32 %v960, %v1184
    %v1186 = vpop.f32.mrb[0].mxu0
    %1187 = vmatprep.mubr.f32.mxu0 0.0
    %1188 = vmatmul.mubr.f32.gmra.mrb[0].mxu0 %v347
    %v1189 = vpop.f32.mrb[0].mxu0
    %v1190 = vadd.f32 %v965, %v1189
    %v1191 = vpop.f32.mrb[0].mxu0
    %1192 = vmatprep.mubr.f32.mxu0 0.0
    %1193 = vmatmul.mubr.f32.gmra.mrb[0].mxu0 %v350
    %v1194 = vpop.f32.mrb[0].mxu0
    %v1195 = vadd.f32 %v970, %v1194
    %v1196 = vpop.f32.mrb[0].mxu0
    %1197 = vmatprep.mubr.f32.mxu0 0.0
    %1198 = vmatmul.mubr.f32.gmra.mrb[0].mxu0 %v353
    %v1199 = vpop.f32.mrb[0].mxu0
    %v1200 = vadd.f32 %v975, %v1199
    %v1201 = vpop.f32.mrb[0].mxu0
    %1202 = vmatprep.mubr.f32.mxu0 0.0
    %1203 = vmatmul.mubr.f32.gmra.mrb[0].mxu0 %v356
    %v1204 = vpop.f32.mrb[0].mxu0
    %v1205 = vadd.f32 %v980, %v1204
    %v1206 = vpop.f32.mrb[0].mxu0
    %1207 = vmatprep.mubr.f32.mxu0 0.0
    %1208 = vmatmul.mubr.f32.gmra.mrb[0].mxu0 %v359
    %v1209 = vpop.f32.mrb[0].mxu0
    %v1210 = vadd.f32 %v985, %v1209
    %v1211 = vpop.f32.mrb[0].mxu0
    %1212 = vmatprep.mubr.f32.mxu0 0.0
    %1213 = vmatmul.mubr.f32.gmra.mrb[0].mxu0 %v362
    %v1214 = vpop.f32.mrb[0].mxu0
    %v1215 = vadd.f32 %v990, %v1214
    %v1216 = vpop.f32.mrb[0].mxu0
    %1217 = vmatprep.mubr.f32.mxu0 0.0
    %1218 = vmatmul.mubr.f32.gmra.mrb[0].mxu0 %v365
    %v1219 = vpop.f32.mrb[0].mxu0
    %v1220 = vadd.f32 %v995, %v1219
    %v1221 = vpop.f32.mrb[0].mxu0
    %1222 = vmatprep.mubr.f32.mxu0 0.0
    %1223 = vmatmul.mubr.f32.gmra.mrb[0].mxu0 %v368
    %v1224 = vpop.f32.mrb[0].mxu0
    %v1225 = vadd.f32 %v1000, %v1224
    %v1226 = vpop.f32.mrb[0].mxu0
    %1227 = vmatprep.mubr.f32.mxu0 0.0
    %1228 = vmatmul.mubr.f32.gmra.mrb[0].mxu0 %v371
    %v1229 = vpop.f32.mrb[0].mxu0
    %v1230 = vadd.f32 %v1005, %v1229
    %v1231 = vpop.f32.mrb[0].mxu0
    %1232 = vmatprep.mubr.f32.mxu0 0.0
    %1233 = vmatmul.mubr.f32.gmra.mrb[0].mxu0 %v374
    %v1234 = vpop.f32.mrb[0].mxu0
    %v1235 = vadd.f32 %v1010, %v1234
    %v1236 = vpop.f32.mrb[0].mxu0
    %1237 = vmatprep.mubr.f32.mxu0 0.0
    %1238 = vmatmul.mubr.f32.gmra.mrb[0].mxu0 %v377
    %v1239 = vpop.f32.mrb[0].mxu0
    %v1240 = vadd.f32 %v1015, %v1239
    %v1241 = vpop.f32.mrb[0].mxu0
    %1242 = vmatprep.mubr.f32.mxu0 0.0
    %1243 = vmatmul.mubr.f32.gmra.mrb[0].mxu0 %v380
    %v1244 = vpop.f32.mrb[0].mxu0
    %v1245 = vadd.f32 %v1020, %v1244
    %v1246 = vpop.f32.mrb[0].mxu0
    %1247 = vmatprep.mubr.f32.mxu0 0.0
    %1248 = vmatmul.mubr.f32.gmra.mrb[0].mxu0 %v383
    %v1249 = vpop.f32.mrb[0].mxu0
    %v1250 = vadd.f32 %v1025, %v1249
    %v1251 = vpop.f32.mrb[0].mxu0
    %1252 = vmatprep.mubr.f32.mxu0 0.0
    %1253 = vmatmul.mubr.f32.gmra.mrb[0].mxu0 %v386
    %v1254 = vpop.f32.mrb[0].mxu0
    %v1255 = vadd.f32 %v1030, %v1254
    %v1256 = vpop.f32.mrb[0].mxu0
    %1257 = vmatprep.mubr.f32.mxu0 0.0
    %1258 = vmatmul.mubr.f32.gmra.mrb[0].mxu0 %v389
    %v1259 = vpop.f32.mrb[0].mxu0
    %v1260 = vadd.f32 %v1035, %v1259
    %v1261 = vpop.f32.mrb[0].mxu0
    %1262 = vmatprep.mubr.f32.mxu0 0.0
    %1263 = vmatmul.mubr.f32.gmra.mrb[0].mxu0 %v392
    %v1264 = vpop.f32.mrb[0].mxu0
    %v1265 = vadd.f32 %v1040, %v1264
    %v1266 = vpop.f32.mrb[0].mxu0
    %1267 = vmatprep.mubr.f32.mxu0 0.0
    %1268 = vmatmul.mubr.f32.gmra.mrb[0].mxu0 %v395
    %v1269 = vpop.f32.mrb[0].mxu0
    %v1270 = vadd.f32 %v1045, %v1269
    %v1271 = vpop.f32.mrb[0].mxu0
    %1272 = vmatprep.mubr.f32.mxu0 0.0
    %1273 = vmatmul.mubr.f32.gmra.mrb[0].mxu0 %v398
    %v1274 = vpop.f32.mrb[0].mxu0
    %v1275 = vadd.f32 %v1050, %v1274
    %v1276 = vpop.f32.mrb[0].mxu0
    %1277 = vmatprep.mubr.f32.mxu0 0.0
    %1278 = vmatmul.mubr.f32.gmra.mrb[0].mxu0 %v401
    %v1279 = vpop.f32.mrb[0].mxu0
    %v1280 = vadd.f32 %v1055, %v1279
    %v1281 = vpop.f32.mrb[0].mxu0
    %1282 = vmatprep.mubr.f32.mxu0 0.0
    %1283 = vmatmul.mubr.f32.gmra.mrb[0].mxu0 %v404
    %v1284 = vpop.f32.mrb[0].mxu0
    %v1285 = vadd.f32 %v1060, %v1284
    %v1286 = vpop.f32.mrb[0].mxu0
    %1287 = vmatprep.mubr.f32.mxu0 0.0
    %1288 = vmatmul.mubr.f32.gmra.mrb[0].mxu0 %v407
    %v1289 = vpop.f32.mrb[0].mxu0
    %v1290 = vadd.f32 %v1065, %v1289
    %v1291 = vpop.f32.mrb[0].mxu0
    %1292 = vmatprep.mubr.f32.mxu0 0.0
    %1293 = vmatmul.mubr.f32.gmra.mrb[0].mxu0 %v410
    %v1294 = vpop.f32.mrb[0].mxu0
    %v1295 = vadd.f32 %v1070, %v1294
    %v1296 = vpop.f32.mrb[0].mxu0
    %1297 = vmatprep.mubr.f32.mxu0 0.0
    %1298 = vmatmul.mubr.f32.gmra.mrb[0].mxu0 %v413
    %v1299 = vpop.f32.mrb[0].mxu0
    %v1300 = vadd.f32 %v1075, %v1299
    %v1301 = vpop.f32.mrb[0].mxu0
    %1302 = vmatprep.mubr.f32.mxu0 0.0
    %1303 = vmatmul.mubr.f32.gmra.mrb[0].mxu0 %v416
    %v1304 = vpop.f32.mrb[0].mxu0
    %v1305 = vadd.f32 %v1080, %v1304
    %v1306 = vpop.f32.mrb[0].mxu0
    %1307 = vmatprep.mubr.f32.mxu0 0.0
    %1308 = vmatmul.mubr.f32.gmra.mrb[0].mxu0 %v419
    %v1309 = vpop.f32.mrb[0].mxu0
    %v1310 = vadd.f32 %v1085, %v1309
    %v1311 = vpop.f32.mrb[0].mxu0
    %1312 = vmatprep.mubr.f32.mxu0 0.0
    %1313 = vmatmul.mubr.f32.gmra.mrb[0].mxu0 %v422
    %v1314 = vpop.f32.mrb[0].mxu0
    %v1315 = vadd.f32 %v1090, %v1314
    %v1316 = vpop.f32.mrb[0].mxu0
    %1317 = vmatprep.mubr.f32.mxu0 0.0
    %1318 = vmatmul.mubr.f32.gmra.mrb[0].mxu0 %v425
    %v1319 = vpop.f32.mrb[0].mxu0
    %v1320 = vadd.f32 %v1095, %v1319
    %v1321 = vpop.f32.mrb[0].mxu0
    %1322 = vmatprep.mubr.f32.mxu0 0.0
    %1323 = vmatmul.mubr.f32.gmra.mrb[0].mxu0 %v428
    %v1324 = vpop.f32.mrb[0].mxu0
    %v1325 = vadd.f32 %v1100, %v1324
    %v1326 = vpop.f32.mrb[0].mxu0
    %1327 = vmatprep.mubr.f32.mxu0 0.0
    %1328 = vmatmul.mubr.f32.gmra.mrb[0].mxu0 %v431
    %v1329 = vpop.f32.mrb[0].mxu0
    %v1330 = vadd.f32 %v1105, %v1329
    %v1331 = vpop.f32.mrb[0].mxu0
    %1332 = vmatprep.mubr.f32.mxu0 0.0
    %1333 = vmatmul.mubr.f32.gmra.mrb[0].mxu0 %v434
    %v1334 = vpop.f32.mrb[0].mxu0
    %v1335 = vadd.f32 %v1110, %v1334
    %v1336 = vpop.f32.mrb[0].mxu0
    %1337 = vdwg.mxu0
    %v1338 = vmax.f32 %v1180, 0.0
    %v1339 = vmax.f32 %v1185, 0.0
    %v1340 = vmax.f32 %v1190, 0.0
    %v1341 = vmax.f32 %v1195, 0.0
    %v1342 = vmax.f32 %v1200, 0.0
    %v1343 = vmax.f32 %v1205, 0.0
    %v1344 = vmax.f32 %v1210, 0.0
    %v1345 = vmax.f32 %v1215, 0.0
    %v1346 = vmax.f32 %v1220, 0.0
    %v1347 = vmax.f32 %v1225, 0.0
    %v1348 = vmax.f32 %v1230, 0.0
    %v1349 = vmax.f32 %v1235, 0.0
    %v1350 = vmax.f32 %v1240, 0.0
    %v1351 = vmax.f32 %v1245, 0.0
    %v1352 = vmax.f32 %v1250, 0.0
    %v1353 = vmax.f32 %v1255, 0.0
    %v1354 = vmax.f32 %v1260, 0.0
    %v1355 = vmax.f32 %v1265, 0.0
    %v1356 = vmax.f32 %v1270, 0.0
    %v1357 = vmax.f32 %v1275, 0.0
    %v1358 = vmax.f32 %v1280, 0.0
    %v1359 = vmax.f32 %v1285, 0.0
    %v1360 = vmax.f32 %v1290, 0.0
    %v1361 = vmax.f32 %v1295, 0.0
    %v1362 = vmax.f32 %v1300, 0.0
    %v1363 = vmax.f32 %v1305, 0.0
    %v1364 = vmax.f32 %v1310, 0.0
    %v1365 = vmax.f32 %v1315, 0.0
    %v1366 = vmax.f32 %v1320, 0.0
    %v1367 = vmax.f32 %v1325, 0.0
    %v1368 = vmax.f32 %v1330, 0.0
    %v1369 = vmax.f32 %v1335, 0.0
    %s1370 = sld [smem:[#allocation4]]
    %s1371 = sld [smem:[#allocation5]]
    %v1372 = vstv %s1371
    %v1373 = vmul.f32 %v1372, %v1338
    %v1374 = vmul.f32 %v1372, %v1339
    %v1375 = vmul.f32 %v1372, %v1340
    %v1376 = vmul.f32 %v1372, %v1341
    %v1377 = vmul.f32 %v1372, %v1342
    %v1378 = vmul.f32 %v1372, %v1343
    %v1379 = vmul.f32 %v1372, %v1344
    %v1380 = vmul.f32 %v1372, %v1345
    %v1381 = vstv %s1370
    %v1382 = vadd.f32 %v1381, %v1373
    %v1383 = vadd.f32 %v1381, %v1374
    %v1384 = vadd.f32 %v1381, %v1375
    %v1385 = vadd.f32 %v1381, %v1376
    %v1386 = vadd.f32 %v1381, %v1377
    %v1387 = vadd.f32 %v1381, %v1378
    %v1388 = vadd.f32 %v1381, %v1379
    %v1389 = vadd.f32 %v1381, %v1380
    %s1390 = sld [smem:[#allocation5 + $0x1]]
    %v1391 = vstv %s1390
    %v1392 = vmul.f32 %v1391, %v1346
    %v1393 = vmul.f32 %v1391, %v1347
    %v1394 = vmul.f32 %v1391, %v1348
    %v1395 = vmul.f32 %v1391, %v1349
    %v1396 = vmul.f32 %v1391, %v1350
    %v1397 = vmul.f32 %v1391, %v1351
    %v1398 = vmul.f32 %v1391, %v1352
    %v1399 = vmul.f32 %v1391, %v1353
    %v1400 = vadd.f32 %v1382, %v1392
    %v1401 = vadd.f32 %v1383, %v1393
    %v1402 = vadd.f32 %v1384, %v1394
    %v1403 = vadd.f32 %v1385, %v1395
    %v1404 = vadd.f32 %v1386, %v1396
    %v1405 = vadd.f32 %v1387, %v1397
    %v1406 = vadd.f32 %v1388, %v1398
    %v1407 = vadd.f32 %v1389, %v1399
    %s1408 = sld [smem:[#allocation5 + $0x2]]
    %v1409 = vstv %s1408
    %v1410 = vmul.f32 %v1409, %v1354
    %v1411 = vmul.f32 %v1409, %v1355
    %v1412 = vmul.f32 %v1409, %v1356
    %v1413 = vmul.f32 %v1409, %v1357
    %v1414 = vmul.f32 %v1409, %v1358
    %v1415 = vmul.f32 %v1409, %v1359
    %v1416 = vmul.f32 %v1409, %v1360
    %v1417 = vmul.f32 %v1409, %v1361
    %v1418 = vadd.f32 %v1400, %v1410
    %v1419 = vadd.f32 %v1401, %v1411
    %v1420 = vadd.f32 %v1402, %v1412
    %v1421 = vadd.f32 %v1403, %v1413
    %v1422 = vadd.f32 %v1404, %v1414
    %v1423 = vadd.f32 %v1405, %v1415
    %v1424 = vadd.f32 %v1406, %v1416
    %v1425 = vadd.f32 %v1407, %v1417
    %s1426 = sld [smem:[#allocation5 + $0x3]]
    %v1427 = vstv %s1426
    %v1428 = vmul.f32 %v1427, %v1362
    %v1429 = vmul.f32 %v1427, %v1363
    %v1430 = vmul.f32 %v1427, %v1364
    %v1431 = vmul.f32 %v1427, %v1365
    %v1432 = vmul.f32 %v1427, %v1366
    %v1433 = vmul.f32 %v1427, %v1367
    %v1434 = vmul.f32 %v1427, %v1368
    %v1435 = vmul.f32 %v1427, %v1369
    %v1436 = vadd.f32 %v1418, %v1428
    %v1437 = vadd.f32 %v1419, %v1429
    %v1438 = vadd.f32 %v1420, %v1430
    %v1439 = vadd.f32 %v1421, %v1431
    %v1440 = vadd.f32 %v1422, %v1432
    %v1441 = vadd.f32 %v1423, %v1433
    %v1442 = vadd.f32 %v1424, %v1434
    %v1443 = vadd.f32 %v1425, %v1435
    %v1444 = vmax.f32 %v1436, 0.0
    %v1445 = vmax.f32 %v1437, 0.0
    %v1446 = vmax.f32 %v1438, 0.0
    %v1447 = vmax.f32 %v1439, 0.0
    %v1448 = vmax.f32 %v1440, 0.0
    %v1449 = vmax.f32 %v1441, 0.0
    %v1450 = vmax.f32 %v1442, 0.0
    %v1451 = vmax.f32 %v1443, 0.0
    %s1452 = sld [smem:[#allocation9]]
    %s1453 = sld [smem:[#allocation7]]
    %v1454 = vstv %s1453
    %v1455 = vmul.f32 %v1454, %v1444
    %v1456 = vmul.f32 %v1454, %v1445
    %v1457 = vstv %s1452
    %v1458 = vadd.f32 %v1457, %v1455
    %v1459 = vadd.f32 %v1457, %v1456
    %s1460 = sld [smem:[#allocation7 + $0x1]]
    %v1461 = vstv %s1460
    %v1462 = vmul.f32 %v1461, %v1446
    %v1463 = vmul.f32 %v1461, %v1447
    %v1464 = vadd.f32 %v1458, %v1462
    %v1465 = vadd.f32 %v1459, %v1463
    %s1466 = sld [smem:[#allocation7 + $0x2]]
    %v1467 = vstv %s1466
    %v1468 = vmul.f32 %v1467, %v1448
    %v1469 = vmul.f32 %v1467, %v1449
    %v1470 = vadd.f32 %v1464, %v1468
    %v1471 = vadd.f32 %v1465, %v1469
    %s1472 = sld [smem:[#allocation7 + $0x3]]
    %v1473 = vstv %s1472
    %v1474 = vmul.f32 %v1473, %v1450
    %v1475 = vmul.f32 %v1473, %v1451
    %v1476 = vadd.f32 %v1470, %v1474
    %v1477 = vadd.f32 %v1471, %v1475
    %v1478 = vmax.f32 %v1476, 0.0
    %v1479 = vmax.f32 %v1477, 0.0
    %vm1480 = vcmask 15360
    %1481 = vst.msk [vmem:[#allocation2] sm:$0xff] %vm1480, %v1478
    %1482 = vst.msk [vmem:[#allocation2 + $0x8] sm:$0xff] %vm1480, %v1479
    %s1483 = sld [smem:[#allocation9 + $0x1]]
    %s1484 = sld [smem:[#allocation7 + $0x4]]
    %v1485 = vstv %s1484
    %v1486 = vmul.f32 %v1485, %v1444
    %v1487 = vmul.f32 %v1485, %v1445
    %v1488 = vstv %s1483
    %v1489 = vadd.f32 %v1488, %v1486
    %v1490 = vadd.f32 %v1488, %v1487
    %s1491 = sld [smem:[#allocation7 + $0x5]]
    %v1492 = vstv %s1491
    %v1493 = vmul.f32 %v1492, %v1446
    %v1494 = vmul.f32 %v1492, %v1447
    %v1495 = vadd.f32 %v1489, %v1493
    %v1496 = vadd.f32 %v1490, %v1494
    %s1497 = sld [smem:[#allocation7 + $0x6]]
    %v1498 = vstv %s1497
    %v1499 = vmul.f32 %v1498, %v1448
    %v1500 = vmul.f32 %v1498, %v1449
    %v1501 = vadd.f32 %v1495, %v1499
    %v1502 = vadd.f32 %v1496, %v1500
    %s1503 = sld [smem:[#allocation7 + $0x7]]
    %v1504 = vstv %s1503
    %v1505 = vmul.f32 %v1504, %v1450
    %v1506 = vmul.f32 %v1504, %v1451
    %v1507 = vadd.f32 %v1501, %v1505
    %v1508 = vadd.f32 %v1502, %v1506
    %v1509 = vmax.f32 %v1507, 0.0
    %v1510 = vmax.f32 %v1508, 0.0
    %1511 = vst.msk [vmem:[#allocation2 + $0x10] sm:$0xff] %vm1480, %v1509
    %1512 = vst.msk [vmem:[#allocation2 + $0x18] sm:$0xff] %vm1480, %v1510
    %s1513 = sld [smem:[#allocation9 + $0x2]]
    %s1514 = sld [smem:[#allocation7 + $0x8]]
    %v1515 = vstv %s1514
    %v1516 = vmul.f32 %v1515, %v1444
    %v1517 = vmul.f32 %v1515, %v1445
    %v1518 = vstv %s1513
    %v1519 = vadd.f32 %v1518, %v1516
    %v1520 = vadd.f32 %v1518, %v1517
    %s1521 = sld [smem:[#allocation7 + $0x9]]
    %v1522 = vstv %s1521
    %v1523 = vmul.f32 %v1522, %v1446
    %v1524 = vmul.f32 %v1522, %v1447
    %v1525 = vadd.f32 %v1519, %v1523
    %v1526 = vadd.f32 %v1520, %v1524
    %s1527 = sld [smem:[#allocation7 + $0xa]]
    %v1528 = vstv %s1527
    %v1529 = vmul.f32 %v1528, %v1448
    %v1530 = vmul.f32 %v1528, %v1449
    %v1531 = vadd.f32 %v1525, %v1529
    %v1532 = vadd.f32 %v1526, %v1530
    %s1533 = sld [smem:[#allocation7 + $0xb]]
    %v1534 = vstv %s1533
    %v1535 = vmul.f32 %v1534, %v1450
    %v1536 = vmul.f32 %v1534, %v1451
    %v1537 = vadd.f32 %v1531, %v1535
    %v1538 = vadd.f32 %v1532, %v1536
    %v1539 = vmax.f32 %v1537, 0.0
    %v1540 = vmax.f32 %v1538, 0.0
    %1541 = vst.msk [vmem:[#allocation2 + $0x20] sm:$0xff] %vm1480, %v1539
    %1542 = vst.msk [vmem:[#allocation2 + $0x28] sm:$0xff] %vm1480, %v1540
    %s1543 = sld [smem:[#allocation9 + $0x3]]
    %s1544 = sld [smem:[#allocation7 + $0xc]]
    %v1545 = vstv %s1544
    %v1546 = vmul.f32 %v1545, %v1444
    %v1547 = vmul.f32 %v1545, %v1445
    %v1548 = vstv %s1543
    %v1549 = vadd.f32 %v1548, %v1546
    %v1550 = vadd.f32 %v1548, %v1547
    %s1551 = sld [smem:[#allocation7 + $0xd]]
    %v1552 = vstv %s1551
    %v1553 = vmul.f32 %v1552, %v1446
    %v1554 = vmul.f32 %v1552, %v1447
    %v1555 = vadd.f32 %v1549, %v1553
    %v1556 = vadd.f32 %v1550, %v1554
    %s1557 = sld [smem:[#allocation7 + $0xe]]
    %v1558 = vstv %s1557
    %v1559 = vmul.f32 %v1558, %v1448
    %v1560 = vmul.f32 %v1558, %v1449
    %v1561 = vadd.f32 %v1555, %v1559
    %v1562 = vadd.f32 %v1556, %v1560
    %s1563 = sld [smem:[#allocation7 + $0xf]]
    %v1564 = vstv %s1563
    %v1565 = vmul.f32 %v1564, %v1450
    %v1566 = vmul.f32 %v1564, %v1451
    %v1567 = vadd.f32 %v1561, %v1565
    %v1568 = vadd.f32 %v1562, %v1566
    %v1569 = vmax.f32 %v1567, 0.0
    %v1570 = vmax.f32 %v1568, 0.0
    %1571 = vst.msk [vmem:[#allocation2 + $0x30] sm:$0xff] %vm1480, %v1569
    %1572 = vst.msk [vmem:[#allocation2 + $0x38] sm:$0xff] %vm1480, %v1570
    %v1573 = vld [vmem:[%s2] sm:$0xff]
    %v1574 = vld [vmem:[%s2 + $0x8] sm:$0x3]
    %v1575 = vld [vmem:[#allocation2] sm:$0xff]
    %v1576 = vld [vmem:[#allocation2 + $0x8] sm:$0xff]
    %v1577 = vld [vmem:[#allocation2 + $0x10] sm:$0xff]
    %v1578 = vld [vmem:[#allocation2 + $0x18] sm:$0xff]
    %v1579 = vld [vmem:[#allocation2 + $0x20] sm:$0xff]
    %v1580 = vld [vmem:[#allocation2 + $0x28] sm:$0xff]
    %v1581 = vld [vmem:[#allocation2 + $0x30] sm:$0xff]
    %v1582 = vld [vmem:[#allocation2 + $0x38] sm:$0xff]
    %v1583 = vld [vmem:[%s3] sm:$0xff]
    %v1584 = vld [vmem:[%s3 + $0x8] sm:$0x3]
    %1586 = vset.pattern.permute.xlu0 0
    %1587 = vperm.xlu0 %1586, %v1583
    %v1588 = vpop.permute.xlu0 %1587
    %1591 = vset.pattern.permute.xlu0 0
    %1592 = vperm.xlu0 %1591, %v1584
    %v1593 = vpop.permute.xlu0 %1592
    %vm1595 = vcmask 523264
    %v1597 = vsel %vm1595, %v1573, 0
    %v1600 = vsel %vm1595, %v1574, 0
    %1602 = vmatprep.subr.mxu0 0.0
    %1603 = vmatpush1.msra.mxu0 %v1575
    %1604 = vmatprep.subr.mxu0 0.0
    %1605 = vmatpush1.msra.mxu0 %v1576
    %1606 = vmatprep.subr.mxu0 0.0
    %1607 = vmatpush1.msra.mxu0 %v1577
    %1608 = vmatprep.subr.mxu0 0.0
    %1609 = vmatpush1.msra.mxu0 %v1578
    %1610 = vmatprep.subr.mxu0 0.0
    %1611 = vmatpush1.msra.mxu0 %v1579
    %1612 = vmatprep.subr.mxu0 0.0
    %1613 = vmatpush1.msra.mxu0 %v1580
    %1614 = vmatprep.subr.mxu0 0.0
    %1615 = vmatpush1.msra.mxu0 %v1581
    %1616 = vmatprep.subr.mxu0 0.0
    %1617 = vmatpush1.msra.mxu0 %v1582
    %1618 = vmatprep.subr.mxu0 0.0
    %1619 = vmatpush1.msra.mxu0 0.0
    %1620 = vmatprep.subr.mxu0 0.0
    %1621 = vmatpush1.msra.mxu0 0.0
    %1622 = vmatprep.subr.mxu0 0.0
    %1623 = vmatpush1.msra.mxu0 0.0
    %1624 = vmatprep.subr.mxu0 0.0
    %1625 = vmatpush1.msra.mxu0 0.0
    %1626 = vmatprep.subr.mxu0 0.0
    %1627 = vmatpush1.msra.mxu0 0.0
    %1628 = vmatprep.subr.mxu0 0.0
    %1629 = vmatpush1.msra.mxu0 0.0
    %1630 = vmatprep.subr.mxu0 0.0
    %1631 = vmatpush1.msra.mxu0 0.0
    %1632 = vmatprep.subr.mxu0 0.0
    %1633 = vmatpush1.msra.mxu0 0.0
    %1634 = vmatprep.subr.mxu0 0.0
    %1635 = vmatpush1.msra.mxu0 0.0
    %1636 = vmatprep.subr.mxu0 0.0
    %1637 = vmatpush1.msra.mxu0 0.0
    %1638 = vmatprep.subr.mxu0 0.0
    %1639 = vmatpush1.msra.mxu0 0.0
    %1640 = vmatprep.subr.mxu0 0.0
    %1641 = vmatpush1.msra.mxu0 0.0
    %1642 = vmatprep.subr.mxu0 0.0
    %1643 = vmatpush1.msra.mxu0 0.0
    %1644 = vmatprep.subr.mxu0 0.0
    %1645 = vmatpush1.msra.mxu0 0.0
    %1646 = vmatprep.subr.mxu0 0.0
    %1647 = vmatpush1.msra.mxu0 0.0
    %1648 = vmatprep.subr.mxu0 0.0
    %1649 = vmatpush1.msra.mxu0 0.0
    %1650 = vmatprep.subr.mxu0 0.0
    %1651 = vmatpush1.msra.mxu0 0.0
    %1652 = vmatprep.subr.mxu0 0.0
    %1653 = vmatpush1.msra.mxu0 0.0
    %1654 = vmatprep.subr.mxu0 0.0
    %1655 = vmatpush1.msra.mxu0 0.0
    %1656 = vmatprep.subr.mxu0 0.0
    %1657 = vmatpush1.msra.mxu0 0.0
    %1658 = vmatprep.subr.mxu0 0.0
    %1659 = vmatpush1.msra.mxu0 0.0
    %1660 = vmatprep.subr.mxu0 0.0
    %1661 = vmatpush1.msra.mxu0 0.0
    %1662 = vmatprep.subr.mxu0 0.0
    %1663 = vmatpush1.msra.mxu0 0.0
    %1664 = vmatprep.subr.mxu0 0.0
    %1665 = vmatpush1.msra.mxu0 0.0
    %1666 = vmatprep.mubr.f32.mxu0 0.0
    %1667 = vmatmul.mubr.f32.gmra.mrb[0].mxu0 %v1597
    %v1668 = vpop.f32.mrb[0].mxu0
    %v1669 = vadd.f32 %v1588, %v1668
    %v1670 = vpop.f32.mrb[0].mxu0
    %1671 = vmatprep.mubr.f32.mxu0 0.0
    %1672 = vmatmul.mubr.f32.gmra.mrb[0].mxu0 %v1600
    %v1673 = vpop.f32.mrb[0].mxu0
    %v1674 = vadd.f32 %v1593, %v1673
    %v1675 = vpop.f32.mrb[0].mxu0
    %1676 = vdwg.mxu0
    %v1678 = vrot.slane %v1669, 1
    %v1680 = vmax.f32 %v1669, %v1678
    %v1681 = vrot.slane %v1669, 2
    %v1683 = vmax.f32 %v1680, %v1681
    %v1684 = vrot.slane %v1669, 3
    %v1686 = vmax.f32 %v1683, %v1684
    %v1687 = vrot.slane %v1669, 4
    %v1689 = vmax.f32 %v1686, %v1687
    %v1690 = vrot.slane %v1669, 5
    %v1692 = vmax.f32 %v1689, %v1690
    %v1693 = vrot.slane %v1669, 6
    %v1695 = vmax.f32 %v1692, %v1693
    %v1696 = vrot.slane %v1669, 7
    %v1698 = vmax.f32 %v1695, %v1696
    %v1699 = vmax.f32 %v1698, %v1674
    %v1701 = vrot.slane %v1674, 1
    %v1703 = vmax.f32 %v1699, %v1701
    %v1704 = vlaneseq
    %v1705 = vshrl.u32 %v1704, 7
    %v1706 = vsub.s32 0, %v1705
    %v1707 = vrot.slane %v1703, %v1706
    %v1708 = vsub.f32 %v1669, %v1707
    %v1709 = vsub.f32 %v1674, %v1707
    %v1710 = vmul.f32 %v1708, 1.442695
    %v1711 = vpow.pop %v1710
    %v1712 = vmul.f32 %v1709, 1.442695
    %v1713 = vpow.pop %v1712
    %v1715 = vrot.slane %v1711, 1
    %v1717 = vadd.f32 %v1711, %v1715
    %v1718 = vrot.slane %v1711, 2
    %v1720 = vadd.f32 %v1717, %v1718
    %v1721 = vrot.slane %v1711, 3
    %v1723 = vadd.f32 %v1720, %v1721
    %v1724 = vrot.slane %v1711, 4
    %v1726 = vadd.f32 %v1723, %v1724
    %v1727 = vrot.slane %v1711, 5
    %v1729 = vadd.f32 %v1726, %v1727
    %v1730 = vrot.slane %v1711, 6
    %v1732 = vadd.f32 %v1729, %v1730
    %v1733 = vrot.slane %v1711, 7
    %v1735 = vadd.f32 %v1732, %v1733
    %v1736 = vadd.f32 %v1735, %v1713
    %v1738 = vrot.slane %v1713, 1
    %v1740 = vadd.f32 %v1736, %v1738
    %v1741 = vrcp.pop %v1740
    %v1742 = vmul.f32 %v1740, %v1741
    %v1743 = vsub.f32 2.0, %v1742
    %v1744 = vmul.f32 %v1741, %v1743
    %v1745 = vlaneseq
    %v1746 = vshrl.u32 %v1745, 7
    %v1747 = vsub.s32 0, %v1746
    %v1748 = vrot.slane %v1744, %v1747
    %v1749 = vmul.f32 %v1711, %v1748
    %v1750 = vmul.f32 %v1713, %v1748
    %1751 = vst.msk [vmem:[%s9] sm:$0xff] %vm1480, %v1749
    %vm1752 = vcmask 9216
    %1753 = vst.msk [vmem:[%s9 + $0x8] sm:$0x3] %vm1752, %v1750
    // Predicated region
    $region50: #{convnet_forward.1} parent=1 // pred_check
      _
    $region51: #{convnet_forward.1} parent=1 // pred_check_branch
      %1755 = sbr.rel (0) target = $region53
    $region52: #{convnet_forward.1} parent=1 // pred_region
      _
    $region53: #{convnet_forward.1} parent=1 // pred_fallthru
      _
    // Predicated region
    $region54: #{convnet_forward.1} parent=1 // pred_check
      _
    $region55: #{convnet_forward.1} parent=1 // pred_check_branch
      %1757 = sbr.rel (0) target = $region57
    $region56: #{convnet_forward.1} parent=1 // pred_region
      _
    $region57: #{convnet_forward.1} parent=1 // pred_fallthru
      _
    %1758 = vsyncpa [#allocation6], 1
    %1759 = vsyncpa [#allocation8], 1

</llo_original>
